<compile_context>
chip_gen: v7x
topology: tpu7x:2x2x1
jax: 0.10.0
libtpu: 0.0.40
codegen_flags: <defaults>
</compile_context>

<pallas_src>
import functools

import jax
import jax.numpy as jnp
from jax.experimental import pallas as pl
from jax.experimental.pallas import tpu as pltpu

B_TILE = 8  # sentences per kernel program (fills vreg sublanes / MXU rows)


def lstm_tagger_kernel(embeds_ref, wih_ref, whh_ref, b_ref, wout_ref, bout_ref,
                       out_ref, *, seq_len, batch_tile):
    """Per-program block shapes:
      embeds_ref: (T*B, E) bf16, rows ordered (t, b)
      wih_ref:    (E, 4H) bf16   (i/f/o columns pre-scaled by 0.5)
      whh_ref:    (H, 4H) bf16   (i/f/o columns pre-scaled by 0.5)
      b_ref:      (1, 4H) f32    (i/f/o entries pre-scaled by 0.5)
      wout_ref:   (H, tags_pad) bf16, bout_ref: (1, tags_pad) f32
      out_ref:    (T*B, tags_pad) f32, rows ordered (t, b)
    """
    T, B = seq_len, batch_tile
    H = whh_ref.shape[0]

    # Hoisted input projection + bias: ONE (T*B, E) @ (E, 4H) MXU matmul, off
    # the serial recurrence chain.
    ih_all = (
        jnp.dot(embeds_ref[...], wih_ref[...],
                preferred_element_type=jnp.float32)
        + b_ref[...]
    )                                                     # (T*B, 4H) f32

    # Pre-split per-step rows (static, 8-sublane-aligned slices), hoisted so
    # the sublane selects are scheduled ahead of the dependency chain.
    ih_rows = [ih_all[t * B:(t + 1) * B, :] for t in range(T)]

    # Mask selecting the g-gate (cell candidate) lanes of a (B, 4H) tile.
    lane = jax.lax.broadcasted_iota(jnp.int32, (B, 4 * H), 1)
    g_mask = jnp.logical_and(lane >= 2 * H, lane < 3 * H)

    whh = whh_ref[...]                                    # (H, 4H) bf16

    # Recurrence, fully unrolled (T small & static). h/c live in vregs.
    h_b = jnp.zeros((B, H), jnp.bfloat16)
    c = jnp.zeros((B, H), jnp.float32)
    hs = []
    for t in range(T):
        gates = ih_rows[t] + jnp.dot(h_b, whh,
                                     preferred_element_type=jnp.float32)
        # Single full-vreg tanh: i/f/o columns were pre-scaled by 0.5, so
        # 0.5*tanh(x/2)+0.5 == sigmoid(x); g lanes keep tanh(x).
        t_act = jnp.tanh(gates)
        act = jnp.where(g_mask, t_act, 0.5 * t_act + 0.5)
        i_g = act[:, 0 * H:1 * H]
        f_g = act[:, 1 * H:2 * H]
        g_g = act[:, 2 * H:3 * H]
        o_g = act[:, 3 * H:4 * H]
        c = f_g * c + i_g * g_g
        h = o_g * jnp.tanh(c)
        hs.append(h)
        # bf16 copy feeds the next step's MXU push (RHS is bf16).
        h_b = h.astype(jnp.bfloat16)

    # (T*B, H) hidden states assembled in vregs — no VMEM round-trip.
    hs_all = jnp.concatenate(hs, axis=0)

    # hidden2tag on a lane-dense (tags padded to 128) tile + stable log_softmax.
    tag_space = (
        jnp.dot(hs_all.astype(jnp.bfloat16), wout_ref[...],
                preferred_element_type=jnp.float32)
        + bout_ref[...]
    )                                                     # (T*B, tags_pad)
    m = jnp.max(tag_space, axis=1, keepdims=True)
    z = tag_space - m
    lse = jnp.log(jnp.sum(jnp.exp(z), axis=1, keepdims=True))
    out_ref[...] = z - lse


def lstm_tagger_forward_batch(sentences, params):
    """sentences: (B_total, T) int32 token ids. Returns (B_total, T, tags)."""
    emb_table, w_ih, w_hh, b, w_out, b_out = params
    B_total, T = sentences.shape
    E = emb_table.shape[1]
    H = w_hh.shape[0]
    tags = w_out.shape[1]

    # Fold the sigmoid 0.5 pre-scale into the non-g gate columns so the kernel
    # uses one tanh per step.  Power-of-2 scaling is exact in bf16.
    gate_scale = jnp.full((1, 4 * H), 0.5, jnp.float32)
    gate_scale = gate_scale.at[:, 2 * H:3 * H].set(1.0)
    w_ih_s = (w_ih * gate_scale).astype(jnp.bfloat16)
    w_hh_s = (w_hh * gate_scale).astype(jnp.bfloat16)
    b_s = b * gate_scale

    # Pad batch to a multiple of B_TILE; padded rows use token 0 and are
    # discarded at the end.
    B_pad = ((B_total + B_TILE - 1) // B_TILE) * B_TILE
    n_chunks = B_pad // B_TILE
    sent_p = jnp.zeros((B_pad, T), sentences.dtype).at[:B_total].set(sentences)

    # Embedding lookup is glue (data-dependent gather) done in plain JAX.
    embeds = emb_table[sent_p]                                # (B_pad, T, E)
    # Per-chunk rows ordered (t, b) so per-step rows are contiguous in-kernel.
    embeds = embeds.reshape(n_chunks, B_TILE, T, E).transpose(0, 2, 1, 3)
    embeds = embeds.reshape(n_chunks * T * B_TILE, E).astype(jnp.bfloat16)

    # Lane-dense tag axis: pad hidden2tag to a multiple of 128 output lanes
    # (zero weights, very-negative bias so padded lanes vanish in softmax).
    tags_pad = max(128, ((tags + 127) // 128) * 128)
    w_out_p = (jnp.zeros((H, tags_pad), jnp.float32)
               .at[:, :tags].set(w_out)).astype(jnp.bfloat16)
    b_out_p = jnp.full((1, tags_pad), -1e30, jnp.float32).at[:, :tags].set(b_out)

    rows = T * B_TILE
    kernel = functools.partial(lstm_tagger_kernel, seq_len=T,
                               batch_tile=B_TILE)
    out = pl.pallas_call(
        kernel,
        out_shape=jax.ShapeDtypeStruct((n_chunks * rows, tags_pad),
                                       jnp.float32),
        grid=(n_chunks,),
        in_specs=[
            pl.BlockSpec((rows, E), lambda i: (i, 0)),        # embeds chunk
            pl.BlockSpec((E, 4 * H), lambda i: (0, 0)),       # W_ih
            pl.BlockSpec((H, 4 * H), lambda i: (0, 0)),       # W_hh
            pl.BlockSpec((1, 4 * H), lambda i: (0, 0)),       # bias
            pl.BlockSpec((H, tags_pad), lambda i: (0, 0)),    # W_out
            pl.BlockSpec((1, tags_pad), lambda i: (0, 0)),    # b_out
        ],
        out_specs=pl.BlockSpec((rows, tags_pad), lambda i: (i, 0)),
        compiler_params=pltpu.CompilerParams(
            dimension_semantics=("parallel",)),  # 2nd TensorCore on v7x
    )(embeds, w_ih_s, w_hh_s, b_s, w_out_p, b_out_p)

    out = out.reshape(n_chunks, T, B_TILE, tags_pad).transpose(0, 2, 1, 3)
    out = out.reshape(B_pad, T, tags_pad)
    return out[:B_total, :, :tags]


def lstm_tagger_forward(sentence, params):
    """Single-sentence forward matching the PyTorch module: (T,) -> (T, tags)."""
    return lstm_tagger_forward_batch(sentence[None, :], params)[0]


def init_params(key, vocab_size, embedding_dim, hidden_dim, tagset_size):
    """Deterministic init mirroring PyTorch defaults (shapes are what matter).
    LSTM weights stored transposed vs PyTorch: W_ih (E, 4H), W_hh (H, 4H),
    gate order i|f|g|o along the 4H axis."""
    k_emb, k_wih, k_whh, k_bih, k_bhh, k_wo, k_bo = jax.random.split(key, 7)
    E, H, Tg = embedding_dim, hidden_dim, tagset_size

    emb_table = jax.random.normal(k_emb, (vocab_size, E), jnp.float32)

    s = 1.0 / jnp.sqrt(H)
    w_ih = jax.random.uniform(k_wih, (E, 4 * H), jnp.float32, -s, s)
    w_hh = jax.random.uniform(k_whh, (H, 4 * H), jnp.float32, -s, s)
    b_ih = jax.random.uniform(k_bih, (4 * H,), jnp.float32, -s, s)
    b_hh = jax.random.uniform(k_bhh, (4 * H,), jnp.float32, -s, s)
    b = (b_ih + b_hh).reshape(1, 4 * H)

    so = 1.0 / jnp.sqrt(H)
    w_out = jax.random.uniform(k_wo, (H, Tg), jnp.float32, -so, so)
    b_out = jax.random.uniform(k_bo, (1, Tg), jnp.float32, -so, so)

    return emb_table, w_ih, w_hh, b, w_out, b_out


def reference_forward_batch(sentences, params, match_kernel_precision=True):
    """Pure-JAX reference (standard sigmoid formulation). With
    match_kernel_precision=True, matmul operands are cast to bf16 like the
    kernel does."""
    emb_table, w_ih, w_hh, b, w_out, b_out = params
    H = w_hh.shape[0]
    embeds = emb_table[sentences]                          # (B, T, E)
    if match_kernel_precision:
        embeds = embeds.astype(jnp.bfloat16)
        w_ih = w_ih.astype(jnp.bfloat16)
        w_hh = w_hh.astype(jnp.bfloat16)
        w_out = w_out.astype(jnp.bfloat16)

    ih_all = jnp.dot(embeds, w_ih, preferred_element_type=jnp.float32) + b

    def step(carry, ih_t):                                 # ih_t: (B, 4H)
        h, c = carry
        gates = ih_t + jnp.dot(h.astype(w_hh.dtype), w_hh,
                               preferred_element_type=jnp.float32)
        i = jax.nn.sigmoid(gates[:, 0 * H:1 * H])
        f = jax.nn.sigmoid(gates[:, 1 * H:2 * H])
        g = jnp.tanh(gates[:, 2 * H:3 * H])
        o = jax.nn.sigmoid(gates[:, 3 * H:4 * H])
        c = f * c + i * g
        h = o * jnp.tanh(c)
        return (h, c), h

    B = sentences.shape[0]
    h0 = jnp.zeros((B, H), jnp.float32)
    (_, _), hs = jax.lax.scan(step, (h0, h0), jnp.swapaxes(ih_all, 0, 1))
    hs_c = hs.astype(w_out.dtype)                          # (T, B, H)
    tag_space = jnp.einsum("tbh,ho->tbo", hs_c, w_out,
                           preferred_element_type=jnp.float32) + b_out
    out = jax.nn.log_softmax(tag_space, axis=-1)           # (T, B, tags)
    return jnp.swapaxes(out, 0, 1)                         # (B, T, tags)


if __name__ == "__main__":
    # Small shapes: seq=8, embedding_dim=32, hidden_dim=32, vocab=16, tags=8.
    SEQ, EMB, HID, VOCAB, TAGS = 8, 32, 32, 16, 8
    BATCH = 16   # 2 chunks of 8 -> grid=(2,), exercises the parallel axis

    key = jax.random.PRNGKey(0)
    k_params, k_sent = jax.random.split(key)
    params = init_params(k_params, VOCAB, EMB, HID, TAGS)
    sentences = jax.random.randint(k_sent, (BATCH, SEQ), 0, VOCAB,
                                   dtype=jnp.int32)

    # Batched path (the performance path).
    out_b = jax.block_until_ready(lstm_tagger_forward_batch(sentences, params))
    assert out_b.shape == (BATCH, SEQ, TAGS)

    # Single-sentence path (matches the PyTorch module's forward signature).
    out_1 = jax.block_until_ready(lstm_tagger_forward(sentences[0], params))
    assert out_1.shape == (SEQ, TAGS)

    ref_match = reference_forward_batch(sentences, params,
                                        match_kernel_precision=True)
    ref_f32 = reference_forward_batch(sentences, params,
                                      match_kernel_precision=False)
    assert jnp.allclose(out_b, ref_match, atol=5e-3, rtol=5e-3), \
        "mismatch vs bf16-matched reference"
    assert jnp.allclose(out_b, ref_f32, atol=5e-2, rtol=5e-2), \
        "mismatch vs f32 reference"
    assert jnp.allclose(out_1, out_b[0], atol=1e-5, rtol=1e-5), \
        "single-sentence path disagrees with batched path"

    print("KERNEL_OK")
</pallas_src>

<mosaic_0001>
module attributes {stable_mosaic.version = 11 : i64} {
  func.func @lstm_tagger_kernel(%arg0: i32, %arg1: memref<64x32xbf16, #tpu.memory_space<vmem>>, %arg2: memref<32x128xbf16, #tpu.memory_space<vmem>>, %arg3: memref<32x128xbf16, #tpu.memory_space<vmem>>, %arg4: memref<1x128xf32, #tpu.memory_space<vmem>>, %arg5: memref<32x128xbf16, #tpu.memory_space<vmem>>, %arg6: memref<1x128xf32, #tpu.memory_space<vmem>>, %arg7: memref<64x128xf32, #tpu.memory_space<vmem>>) attributes {dimension_semantics = [#tpu.dimension_semantics<parallel>], iteration_bounds = array<i64: 2>, scalar_prefetch = 0 : i64, scratch_operands = 0 : i64, tpu.core_type = #tpu.core_type<tc>, window_params = [{transform_indices = @transform_0, window_bounds = array<i64: 64, 32>}, {pipeline_mode = #tpu.pipeline_mode<synchronous>, transform_indices = @transform_1, window_bounds = array<i64: 32, 128>}, {pipeline_mode = #tpu.pipeline_mode<synchronous>, transform_indices = @transform_2, window_bounds = array<i64: 32, 128>}, {pipeline_mode = #tpu.pipeline_mode<synchronous>, transform_indices = @transform_3, window_bounds = array<i64: 1, 128>}, {pipeline_mode = #tpu.pipeline_mode<synchronous>, transform_indices = @transform_4, window_bounds = array<i64: 32, 128>}, {pipeline_mode = #tpu.pipeline_mode<synchronous>, transform_indices = @transform_5, window_bounds = array<i64: 1, 128>}, {transform_indices = @transform_6, window_bounds = array<i64: 64, 128>}]} {
    %c0 = arith.constant 0 : index
    %c0_0 = arith.constant 0 : index
    %0 = vector.load %arg1[%c0, %c0_0] : memref<64x32xbf16, #tpu.memory_space<vmem>>, vector<64x32xbf16>
    %c0_1 = arith.constant 0 : index
    %c0_2 = arith.constant 0 : index
    %1 = vector.load %arg2[%c0_1, %c0_2] : memref<32x128xbf16, #tpu.memory_space<vmem>>, vector<32x128xbf16>
    %cst = arith.constant dense<0.000000e+00> : vector<64x128xf32>
    %2 = tpu.matmul %0, %1, %cst {dimension_numbers = #tpu.dot_dimension_numbers<[1], [0], [0], [1], [0, 0, 1, 1], [], []>} : vector<64x32xbf16>, vector<32x128xbf16>, vector<64x128xf32> -> vector<64x128xf32>
    %c0_3 = arith.constant 0 : index
    %c0_4 = arith.constant 0 : index
    %3 = vector.load %arg4[%c0_3, %c0_4] : memref<1x128xf32, #tpu.memory_space<vmem>>, vector<1x128xf32>
    %4 = vector.broadcast %3 : vector<1x128xf32> to vector<64x128xf32>
    %5 = arith.addf %2, %4 : vector<64x128xf32>
    %6 = vector.extract_strided_slice %5 {offsets = [0, 0], sizes = [8, 128], strides = [1, 1]} : vector<64x128xf32> to vector<8x128xf32>
    %7 = vector.extract_strided_slice %5 {offsets = [8, 0], sizes = [8, 128], strides = [1, 1]} : vector<64x128xf32> to vector<8x128xf32>
    %8 = vector.extract_strided_slice %5 {offsets = [16, 0], sizes = [8, 128], strides = [1, 1]} : vector<64x128xf32> to vector<8x128xf32>
    %9 = vector.extract_strided_slice %5 {offsets = [24, 0], sizes = [8, 128], strides = [1, 1]} : vector<64x128xf32> to vector<8x128xf32>
    %10 = vector.extract_strided_slice %5 {offsets = [32, 0], sizes = [8, 128], strides = [1, 1]} : vector<64x128xf32> to vector<8x128xf32>
    %11 = vector.extract_strided_slice %5 {offsets = [40, 0], sizes = [8, 128], strides = [1, 1]} : vector<64x128xf32> to vector<8x128xf32>
    %12 = vector.extract_strided_slice %5 {offsets = [48, 0], sizes = [8, 128], strides = [1, 1]} : vector<64x128xf32> to vector<8x128xf32>
    %13 = vector.extract_strided_slice %5 {offsets = [56, 0], sizes = [8, 128], strides = [1, 1]} : vector<64x128xf32> to vector<8x128xf32>
    %14 = tpu.iota {dimensions = array<i32: 1>} : vector<8x128xi32>
    %c64_i32 = arith.constant 64 : i32
    %15 = vector.broadcast %c64_i32 : i32 to vector<8x128xi32>
    %16 = arith.cmpi sge, %14, %15 : vector<8x128xi32>
    %c96_i32 = arith.constant 96 : i32
    %17 = vector.broadcast %c96_i32 : i32 to vector<8x128xi32>
    %18 = arith.cmpi slt, %14, %17 : vector<8x128xi32>
    %19 = arith.andi %16, %18 : vector<8x128xi1>
    %c0_5 = arith.constant 0 : index
    %c0_6 = arith.constant 0 : index
    %20 = vector.load %arg3[%c0_5, %c0_6] : memref<32x128xbf16, #tpu.memory_space<vmem>>, vector<32x128xbf16>
    %cst_7 = arith.constant 0.000000e+00 : bf16
    %21 = vector.broadcast %cst_7 : bf16 to vector<8x32xbf16>
    %cst_8 = arith.constant 0.000000e+00 : f32
    %22 = vector.broadcast %cst_8 : f32 to vector<8x32xf32>
    %cst_9 = arith.constant dense<0.000000e+00> : vector<8x128xf32>
    %23 = tpu.matmul %21, %20, %cst_9 {dimension_numbers = #tpu.dot_dimension_numbers<[1], [0], [0], [1], [0, 0, 1, 1], [], []>} : vector<8x32xbf16>, vector<32x128xbf16>, vector<8x128xf32> -> vector<8x128xf32>
    %24 = arith.addf %6, %23 : vector<8x128xf32>
    %25 = math.tanh %24 : vector<8x128xf32>
    %cst_10 = arith.constant 5.000000e-01 : f32
    %26 = vector.broadcast %cst_10 : f32 to vector<8x128xf32>
    %27 = arith.mulf %26, %25 : vector<8x128xf32>
    %cst_11 = arith.constant 5.000000e-01 : f32
    %28 = vector.broadcast %cst_11 : f32 to vector<8x128xf32>
    %29 = arith.addf %27, %28 : vector<8x128xf32>
    %30 = arith.select %19, %25, %29 : vector<8x128xi1>, vector<8x128xf32>
    %31 = vector.extract_strided_slice %30 {offsets = [0, 0], sizes = [8, 32], strides = [1, 1]} : vector<8x128xf32> to vector<8x32xf32>
    %32 = vector.extract_strided_slice %30 {offsets = [0, 32], sizes = [8, 32], strides = [1, 1]} : vector<8x128xf32> to vector<8x32xf32>
    %33 = vector.extract_strided_slice %30 {offsets = [0, 64], sizes = [8, 32], strides = [1, 1]} : vector<8x128xf32> to vector<8x32xf32>
    %34 = vector.extract_strided_slice %30 {offsets = [0, 96], sizes = [8, 32], strides = [1, 1]} : vector<8x128xf32> to vector<8x32xf32>
    %35 = arith.mulf %32, %22 : vector<8x32xf32>
    %36 = arith.mulf %31, %33 : vector<8x32xf32>
    %37 = arith.addf %35, %36 : vector<8x32xf32>
    %38 = math.tanh %37 : vector<8x32xf32>
    %39 = arith.mulf %34, %38 : vector<8x32xf32>
    %40 = arith.truncf %39 : vector<8x32xf32> to vector<8x32xbf16>
    %cst_12 = arith.constant dense<0.000000e+00> : vector<8x128xf32>
    %41 = tpu.matmul %40, %20, %cst_12 {dimension_numbers = #tpu.dot_dimension_numbers<[1], [0], [0], [1], [0, 0, 1, 1], [], []>} : vector<8x32xbf16>, vector<32x128xbf16>, vector<8x128xf32> -> vector<8x128xf32>
    %42 = arith.addf %7, %41 : vector<8x128xf32>
    %43 = math.tanh %42 : vector<8x128xf32>
    %cst_13 = arith.constant 5.000000e-01 : f32
    %44 = vector.broadcast %cst_13 : f32 to vector<8x128xf32>
    %45 = arith.mulf %44, %43 : vector<8x128xf32>
    %cst_14 = arith.constant 5.000000e-01 : f32
    %46 = vector.broadcast %cst_14 : f32 to vector<8x128xf32>
    %47 = arith.addf %45, %46 : vector<8x128xf32>
    %48 = arith.select %19, %43, %47 : vector<8x128xi1>, vector<8x128xf32>
    %49 = vector.extract_strided_slice %48 {offsets = [0, 0], sizes = [8, 32], strides = [1, 1]} : vector<8x128xf32> to vector<8x32xf32>
    %50 = vector.extract_strided_slice %48 {offsets = [0, 32], sizes = [8, 32], strides = [1, 1]} : vector<8x128xf32> to vector<8x32xf32>
    %51 = vector.extract_strided_slice %48 {offsets = [0, 64], sizes = [8, 32], strides = [1, 1]} : vector<8x128xf32> to vector<8x32xf32>
    %52 = vector.extract_strided_slice %48 {offsets = [0, 96], sizes = [8, 32], strides = [1, 1]} : vector<8x128xf32> to vector<8x32xf32>
    %53 = arith.mulf %50, %37 : vector<8x32xf32>
    %54 = arith.mulf %49, %51 : vector<8x32xf32>
    %55 = arith.addf %53, %54 : vector<8x32xf32>
    %56 = math.tanh %55 : vector<8x32xf32>
    %57 = arith.mulf %52, %56 : vector<8x32xf32>
    %58 = arith.truncf %57 : vector<8x32xf32> to vector<8x32xbf16>
    %cst_15 = arith.constant dense<0.000000e+00> : vector<8x128xf32>
    %59 = tpu.matmul %58, %20, %cst_15 {dimension_numbers = #tpu.dot_dimension_numbers<[1], [0], [0], [1], [0, 0, 1, 1], [], []>} : vector<8x32xbf16>, vector<32x128xbf16>, vector<8x128xf32> -> vector<8x128xf32>
    %60 = arith.addf %8, %59 : vector<8x128xf32>
    %61 = math.tanh %60 : vector<8x128xf32>
    %cst_16 = arith.constant 5.000000e-01 : f32
    %62 = vector.broadcast %cst_16 : f32 to vector<8x128xf32>
    %63 = arith.mulf %62, %61 : vector<8x128xf32>
    %cst_17 = arith.constant 5.000000e-01 : f32
    %64 = vector.broadcast %cst_17 : f32 to vector<8x128xf32>
    %65 = arith.addf %63, %64 : vector<8x128xf32>
    %66 = arith.select %19, %61, %65 : vector<8x128xi1>, vector<8x128xf32>
    %67 = vector.extract_strided_slice %66 {offsets = [0, 0], sizes = [8, 32], strides = [1, 1]} : vector<8x128xf32> to vector<8x32xf32>
    %68 = vector.extract_strided_slice %66 {offsets = [0, 32], sizes = [8, 32], strides = [1, 1]} : vector<8x128xf32> to vector<8x32xf32>
    %69 = vector.extract_strided_slice %66 {offsets = [0, 64], sizes = [8, 32], strides = [1, 1]} : vector<8x128xf32> to vector<8x32xf32>
    %70 = vector.extract_strided_slice %66 {offsets = [0, 96], sizes = [8, 32], strides = [1, 1]} : vector<8x128xf32> to vector<8x32xf32>
    %71 = arith.mulf %68, %55 : vector<8x32xf32>
    %72 = arith.mulf %67, %69 : vector<8x32xf32>
    %73 = arith.addf %71, %72 : vector<8x32xf32>
    %74 = math.tanh %73 : vector<8x32xf32>
    %75 = arith.mulf %70, %74 : vector<8x32xf32>
    %76 = arith.truncf %75 : vector<8x32xf32> to vector<8x32xbf16>
    %cst_18 = arith.constant dense<0.000000e+00> : vector<8x128xf32>
    %77 = tpu.matmul %76, %20, %cst_18 {dimension_numbers = #tpu.dot_dimension_numbers<[1], [0], [0], [1], [0, 0, 1, 1], [], []>} : vector<8x32xbf16>, vector<32x128xbf16>, vector<8x128xf32> -> vector<8x128xf32>
    %78 = arith.addf %9, %77 : vector<8x128xf32>
    %79 = math.tanh %78 : vector<8x128xf32>
    %cst_19 = arith.constant 5.000000e-01 : f32
    %80 = vector.broadcast %cst_19 : f32 to vector<8x128xf32>
    %81 = arith.mulf %80, %79 : vector<8x128xf32>
    %cst_20 = arith.constant 5.000000e-01 : f32
    %82 = vector.broadcast %cst_20 : f32 to vector<8x128xf32>
    %83 = arith.addf %81, %82 : vector<8x128xf32>
    %84 = arith.select %19, %79, %83 : vector<8x128xi1>, vector<8x128xf32>
    %85 = vector.extract_strided_slice %84 {offsets = [0, 0], sizes = [8, 32], strides = [1, 1]} : vector<8x128xf32> to vector<8x32xf32>
    %86 = vector.extract_strided_slice %84 {offsets = [0, 32], sizes = [8, 32], strides = [1, 1]} : vector<8x128xf32> to vector<8x32xf32>
    %87 = vector.extract_strided_slice %84 {offsets = [0, 64], sizes = [8, 32], strides = [1, 1]} : vector<8x128xf32> to vector<8x32xf32>
    %88 = vector.extract_strided_slice %84 {offsets = [0, 96], sizes = [8, 32], strides = [1, 1]} : vector<8x128xf32> to vector<8x32xf32>
    %89 = arith.mulf %86, %73 : vector<8x32xf32>
    %90 = arith.mulf %85, %87 : vector<8x32xf32>
    %91 = arith.addf %89, %90 : vector<8x32xf32>
    %92 = math.tanh %91 : vector<8x32xf32>
    %93 = arith.mulf %88, %92 : vector<8x32xf32>
    %94 = arith.truncf %93 : vector<8x32xf32> to vector<8x32xbf16>
    %cst_21 = arith.constant dense<0.000000e+00> : vector<8x128xf32>
    %95 = tpu.matmul %94, %20, %cst_21 {dimension_numbers = #tpu.dot_dimension_numbers<[1], [0], [0], [1], [0, 0, 1, 1], [], []>} : vector<8x32xbf16>, vector<32x128xbf16>, vector<8x128xf32> -> vector<8x128xf32>
    %96 = arith.addf %10, %95 : vector<8x128xf32>
    %97 = math.tanh %96 : vector<8x128xf32>
    %cst_22 = arith.constant 5.000000e-01 : f32
    %98 = vector.broadcast %cst_22 : f32 to vector<8x128xf32>
    %99 = arith.mulf %98, %97 : vector<8x128xf32>
    %cst_23 = arith.constant 5.000000e-01 : f32
    %100 = vector.broadcast %cst_23 : f32 to vector<8x128xf32>
    %101 = arith.addf %99, %100 : vector<8x128xf32>
    %102 = arith.select %19, %97, %101 : vector<8x128xi1>, vector<8x128xf32>
    %103 = vector.extract_strided_slice %102 {offsets = [0, 0], sizes = [8, 32], strides = [1, 1]} : vector<8x128xf32> to vector<8x32xf32>
    %104 = vector.extract_strided_slice %102 {offsets = [0, 32], sizes = [8, 32], strides = [1, 1]} : vector<8x128xf32> to vector<8x32xf32>
    %105 = vector.extract_strided_slice %102 {offsets = [0, 64], sizes = [8, 32], strides = [1, 1]} : vector<8x128xf32> to vector<8x32xf32>
    %106 = vector.extract_strided_slice %102 {offsets = [0, 96], sizes = [8, 32], strides = [1, 1]} : vector<8x128xf32> to vector<8x32xf32>
    %107 = arith.mulf %104, %91 : vector<8x32xf32>
    %108 = arith.mulf %103, %105 : vector<8x32xf32>
    %109 = arith.addf %107, %108 : vector<8x32xf32>
    %110 = math.tanh %109 : vector<8x32xf32>
    %111 = arith.mulf %106, %110 : vector<8x32xf32>
    %112 = arith.truncf %111 : vector<8x32xf32> to vector<8x32xbf16>
    %cst_24 = arith.constant dense<0.000000e+00> : vector<8x128xf32>
    %113 = tpu.matmul %112, %20, %cst_24 {dimension_numbers = #tpu.dot_dimension_numbers<[1], [0], [0], [1], [0, 0, 1, 1], [], []>} : vector<8x32xbf16>, vector<32x128xbf16>, vector<8x128xf32> -> vector<8x128xf32>
    %114 = arith.addf %11, %113 : vector<8x128xf32>
    %115 = math.tanh %114 : vector<8x128xf32>
    %cst_25 = arith.constant 5.000000e-01 : f32
    %116 = vector.broadcast %cst_25 : f32 to vector<8x128xf32>
    %117 = arith.mulf %116, %115 : vector<8x128xf32>
    %cst_26 = arith.constant 5.000000e-01 : f32
    %118 = vector.broadcast %cst_26 : f32 to vector<8x128xf32>
    %119 = arith.addf %117, %118 : vector<8x128xf32>
    %120 = arith.select %19, %115, %119 : vector<8x128xi1>, vector<8x128xf32>
    %121 = vector.extract_strided_slice %120 {offsets = [0, 0], sizes = [8, 32], strides = [1, 1]} : vector<8x128xf32> to vector<8x32xf32>
    %122 = vector.extract_strided_slice %120 {offsets = [0, 32], sizes = [8, 32], strides = [1, 1]} : vector<8x128xf32> to vector<8x32xf32>
    %123 = vector.extract_strided_slice %120 {offsets = [0, 64], sizes = [8, 32], strides = [1, 1]} : vector<8x128xf32> to vector<8x32xf32>
    %124 = vector.extract_strided_slice %120 {offsets = [0, 96], sizes = [8, 32], strides = [1, 1]} : vector<8x128xf32> to vector<8x32xf32>
    %125 = arith.mulf %122, %109 : vector<8x32xf32>
    %126 = arith.mulf %121, %123 : vector<8x32xf32>
    %127 = arith.addf %125, %126 : vector<8x32xf32>
    %128 = math.tanh %127 : vector<8x32xf32>
    %129 = arith.mulf %124, %128 : vector<8x32xf32>
    %130 = arith.truncf %129 : vector<8x32xf32> to vector<8x32xbf16>
    %cst_27 = arith.constant dense<0.000000e+00> : vector<8x128xf32>
    %131 = tpu.matmul %130, %20, %cst_27 {dimension_numbers = #tpu.dot_dimension_numbers<[1], [0], [0], [1], [0, 0, 1, 1], [], []>} : vector<8x32xbf16>, vector<32x128xbf16>, vector<8x128xf32> -> vector<8x128xf32>
    %132 = arith.addf %12, %131 : vector<8x128xf32>
    %133 = math.tanh %132 : vector<8x128xf32>
    %cst_28 = arith.constant 5.000000e-01 : f32
    %134 = vector.broadcast %cst_28 : f32 to vector<8x128xf32>
    %135 = arith.mulf %134, %133 : vector<8x128xf32>
    %cst_29 = arith.constant 5.000000e-01 : f32
    %136 = vector.broadcast %cst_29 : f32 to vector<8x128xf32>
    %137 = arith.addf %135, %136 : vector<8x128xf32>
    %138 = arith.select %19, %133, %137 : vector<8x128xi1>, vector<8x128xf32>
    %139 = vector.extract_strided_slice %138 {offsets = [0, 0], sizes = [8, 32], strides = [1, 1]} : vector<8x128xf32> to vector<8x32xf32>
    %140 = vector.extract_strided_slice %138 {offsets = [0, 32], sizes = [8, 32], strides = [1, 1]} : vector<8x128xf32> to vector<8x32xf32>
    %141 = vector.extract_strided_slice %138 {offsets = [0, 64], sizes = [8, 32], strides = [1, 1]} : vector<8x128xf32> to vector<8x32xf32>
    %142 = vector.extract_strided_slice %138 {offsets = [0, 96], sizes = [8, 32], strides = [1, 1]} : vector<8x128xf32> to vector<8x32xf32>
    %143 = arith.mulf %140, %127 : vector<8x32xf32>
    %144 = arith.mulf %139, %141 : vector<8x32xf32>
    %145 = arith.addf %143, %144 : vector<8x32xf32>
    %146 = math.tanh %145 : vector<8x32xf32>
    %147 = arith.mulf %142, %146 : vector<8x32xf32>
    %148 = arith.truncf %147 : vector<8x32xf32> to vector<8x32xbf16>
    %cst_30 = arith.constant dense<0.000000e+00> : vector<8x128xf32>
    %149 = tpu.matmul %148, %20, %cst_30 {dimension_numbers = #tpu.dot_dimension_numbers<[1], [0], [0], [1], [0, 0, 1, 1], [], []>} : vector<8x32xbf16>, vector<32x128xbf16>, vector<8x128xf32> -> vector<8x128xf32>
    %150 = arith.addf %13, %149 : vector<8x128xf32>
    %151 = math.tanh %150 : vector<8x128xf32>
    %cst_31 = arith.constant 5.000000e-01 : f32
    %152 = vector.broadcast %cst_31 : f32 to vector<8x128xf32>
    %153 = arith.mulf %152, %151 : vector<8x128xf32>
    %cst_32 = arith.constant 5.000000e-01 : f32
    %154 = vector.broadcast %cst_32 : f32 to vector<8x128xf32>
    %155 = arith.addf %153, %154 : vector<8x128xf32>
    %156 = arith.select %19, %151, %155 : vector<8x128xi1>, vector<8x128xf32>
    %157 = vector.extract_strided_slice %156 {offsets = [0, 0], sizes = [8, 32], strides = [1, 1]} : vector<8x128xf32> to vector<8x32xf32>
    %158 = vector.extract_strided_slice %156 {offsets = [0, 32], sizes = [8, 32], strides = [1, 1]} : vector<8x128xf32> to vector<8x32xf32>
    %159 = vector.extract_strided_slice %156 {offsets = [0, 64], sizes = [8, 32], strides = [1, 1]} : vector<8x128xf32> to vector<8x32xf32>
    %160 = vector.extract_strided_slice %156 {offsets = [0, 96], sizes = [8, 32], strides = [1, 1]} : vector<8x128xf32> to vector<8x32xf32>
    %161 = arith.mulf %158, %145 : vector<8x32xf32>
    %162 = arith.mulf %157, %159 : vector<8x32xf32>
    %163 = arith.addf %161, %162 : vector<8x32xf32>
    %164 = math.tanh %163 : vector<8x32xf32>
    %165 = arith.mulf %160, %164 : vector<8x32xf32>
    %166 = tpu.concatenate %39, %57, %75, %93, %111, %129, %147, %165 in 0 : vector<8x32xf32>, vector<8x32xf32>, vector<8x32xf32>, vector<8x32xf32>, vector<8x32xf32>, vector<8x32xf32>, vector<8x32xf32>, vector<8x32xf32> -> vector<64x32xf32>
    %167 = arith.truncf %166 : vector<64x32xf32> to vector<64x32xbf16>
    %c0_33 = arith.constant 0 : index
    %c0_34 = arith.constant 0 : index
    %168 = vector.load %arg5[%c0_33, %c0_34] : memref<32x128xbf16, #tpu.memory_space<vmem>>, vector<32x128xbf16>
    %cst_35 = arith.constant dense<0.000000e+00> : vector<64x128xf32>
    %169 = tpu.matmul %167, %168, %cst_35 {dimension_numbers = #tpu.dot_dimension_numbers<[1], [0], [0], [1], [0, 0, 1, 1], [], []>} : vector<64x32xbf16>, vector<32x128xbf16>, vector<64x128xf32> -> vector<64x128xf32>
    %c0_36 = arith.constant 0 : index
    %c0_37 = arith.constant 0 : index
    %170 = vector.load %arg6[%c0_36, %c0_37] : memref<1x128xf32, #tpu.memory_space<vmem>>, vector<1x128xf32>
    %171 = vector.broadcast %170 : vector<1x128xf32> to vector<64x128xf32>
    %172 = arith.addf %169, %171 : vector<64x128xf32>
    %cst_38 = arith.constant dense<0xFF800000> : vector<64xf32>
    %173 = vector.multi_reduction <maximumf>, %172, %cst_38 [1] : vector<64x128xf32> to vector<64xf32>
    %174 = vector.shape_cast %173 : vector<64xf32> to vector<64x1xf32>
    %175 = vector.broadcast %174 : vector<64x1xf32> to vector<64x128xf32>
    %176 = arith.subf %172, %175 : vector<64x128xf32>
    %177 = math.exp %176 : vector<64x128xf32>
    %cst_39 = arith.constant dense<0.000000e+00> : vector<64xf32>
    %178 = vector.multi_reduction <add>, %177, %cst_39 [1] : vector<64x128xf32> to vector<64xf32>
    %179 = vector.shape_cast %178 : vector<64xf32> to vector<64x1xf32>
    %180 = math.log %179 : vector<64x1xf32>
    %181 = vector.broadcast %180 : vector<64x1xf32> to vector<64x128xf32>
    %182 = arith.subf %176, %181 : vector<64x128xf32>
    %c0_40 = arith.constant 0 : index
    %c0_41 = arith.constant 0 : index
    %183 = vector.load %arg7[%c0_40, %c0_41] : memref<64x128xf32, #tpu.memory_space<vmem>>, vector<64x128xf32>
    tpu.vector_store %arg7[%c0_40, %c0_41], %182 {strides = array<i32>} : memref<64x128xf32, #tpu.memory_space<vmem>>, vector<64x128xf32>,
    return
  }
  func.func @transform_0(%arg0: i32) -> (i32, i32) {
    %c0_i32 = arith.constant 0 : i32
    %c0_i32_0 = arith.constant 0 : i32
    return %arg0, %c0_i32 : i32, i32
  }
  func.func @transform_1(%arg0: i32) -> (i32, i32) {
    %c0_i32 = arith.constant 0 : i32
    %c0_i32_0 = arith.constant 0 : i32
    %c0_i32_1 = arith.constant 0 : i32
    return %c0_i32, %c0_i32_0 : i32, i32
  }
  func.func @transform_2(%arg0: i32) -> (i32, i32) {
    %c0_i32 = arith.constant 0 : i32
    %c0_i32_0 = arith.constant 0 : i32
    %c0_i32_1 = arith.constant 0 : i32
    return %c0_i32, %c0_i32_0 : i32, i32
  }
  func.func @transform_3(%arg0: i32) -> (i32, i32) {
    %c0_i32 = arith.constant 0 : i32
    %c0_i32_0 = arith.constant 0 : i32
    %c0_i32_1 = arith.constant 0 : i32
    return %c0_i32, %c0_i32_0 : i32, i32
  }
  func.func @transform_4(%arg0: i32) -> (i32, i32) {
    %c0_i32 = arith.constant 0 : i32
    %c0_i32_0 = arith.constant 0 : i32
    %c0_i32_1 = arith.constant 0 : i32
    return %c0_i32, %c0_i32_0 : i32, i32
  }
  func.func @transform_5(%arg0: i32) -> (i32, i32) {
    %c0_i32 = arith.constant 0 : i32
    %c0_i32_0 = arith.constant 0 : i32
    %c0_i32_1 = arith.constant 0 : i32
    return %c0_i32, %c0_i32_0 : i32, i32
  }
  func.func @transform_6(%arg0: i32) -> (i32, i32) {
    %c0_i32 = arith.constant 0 : i32
    %c0_i32_0 = arith.constant 0 : i32
    return %arg0, %c0_i32 : i32, i32
  }
}

</mosaic_0001>

<llo_original>
// kernel: tpu_custom_call.1
$region0: #{tpu_custom_call.1}
  #allocation0 [shape = 'u32[]', space=smem, size = 0x4, offset = 0x4, fixed_abs, tag = 'smem constant byte address 0x4 - core index']
  #allocation1 [shape = 'u32[144,128]{1,0:T(1,128)}', space=vmem, size = 0x12000, scoped, tag = 'internal scratch']
  %s0 = inlined_call_operand.vmem [shape: bf16[128,32], index: 0, kind: input, shape index: {}]
  %s1 = inlined_call_operand.vmem [shape: bf16[32,128], index: 1, kind: input, shape index: {}]
  %s2 = inlined_call_operand.vmem [shape: bf16[32,128], index: 2, kind: input, shape index: {}]
  %s3 = inlined_call_operand.vmem [shape: f32[1,128], index: 3, kind: input, shape index: {}]
  %s4 = inlined_call_operand.vmem [shape: bf16[32,128], index: 4, kind: input, shape index: {}]
  %s5 = inlined_call_operand.vmem [shape: f32[1,128], index: 5, kind: input, shape index: {}]
  %s6 = inlined_call_operand.hbm [shape: f32[128,128], index: 6, kind: output, shape index: {}]
  %s7 = sld [smem:[#allocation0]]
  $region57: #{tpu_custom_call.1} parent=0
    _
  %s9 = ssub.s32 1, %s7
  %s10 = scalar_select 0, %s9, %s7
  $region1: #{tpu_custom_call.1} parent=0
    #allocation2 [shape = 'u8[65536]{0}', space=vmem, size = 0x10000, scoped, tag = 'output window, operand 0']
    #allocation3 [shape = 's32[2]{0}', space=sflag, size = 0x8, scoped, tag = 'scoped memory for tpu_custom_call.1']
    %11 = vsyncpa [#allocation3], 0
    %s12 = scalar_lea.sflag [#allocation3], 1
    %13 = vsyncpa %s12, 0
    loop: start=0, step=1, limit=4
    $region2: #{tpu_custom_call.1} parent=1 // loop_pre_header
      _
    $region3: #{tpu_custom_call.1} parent=1 // loop_header
      %s15 = sphi 0, %s19
      %p16 = scmp.ge.s32.totalorder %s15, 4
      %s25 = sphi 0, %s27
      %s28 = sphi 0, %s25
      %s29 = sphi 0, %s28
      %s45 = sphi 0, %s29
      %s49 = sphi 0, %s49
      %s51 = sphi 0, %s49
      %s52 = sphi 0, %s51
      %s66 = sphi 0, %s52
      %s70 = sphi 0, %s70
      %s72 = sphi 0, %s70
      %s73 = sphi 0, %s72
      %s87 = sphi 0, %s73
      %s91 = sphi 0, %s91
      %s93 = sphi 0, %s91
      %s94 = sphi 0, %s93
      %s108 = sphi 0, %s94
      %s112 = sphi 0, %s112
      %s114 = sphi 0, %s112
      %s115 = sphi 0, %s114
      %s129 = sphi 0, %s115
      %s133 = sphi 0, %s133
      %s135 = sphi 0, %s133
      %s136 = sphi 0, %s135
      %s150 = sphi 0, %s136
      %s156 = sphi 0, %s158
      %s159 = sphi 0, %s156
      %s160 = sphi 0, %s159
      %s176 = sphi 0, %s160
    $region4: #{tpu_custom_call.1} parent=1 // loop_header_branch
      %18 = sbr.rel (%p16) target = $region8
    $region5: #{tpu_custom_call.1} parent=1 // loop_body
      %s20 = ssub.s32 %s15, 1
      %s21 = ssub.s32 %s15, 2
      %s22 = sadd.s32 %s15, 1
      %s23 = ssub.s32 %s15, %s22
      %p24 = scmp.eq.s32.totalorder %s23, 0
      %s26 = sadd.s32 %s25, 1
      %s27 = scalar_select %p24, %s25, %s26
      %p30 = pneg %p24
      %p31 = scmp.eq.s32.totalorder %s15, 1
      %p32 = por %p30, %p31
      %p33 = scmp.ne.s32.totalorder %s25, %s28
      %p34 = scmp.eq.s32.totalorder %s15, 0
      %p35 = por %p33, %p34
      %p36 = scmp.ne.s32.totalorder %s25, %s28
      %p37 = scmp.eq.s32.totalorder %s20, 1
      %p38 = por %p36, %p37
      %p39 = scmp.ne.s32.totalorder %s28, %s29
      %p40 = scmp.eq.s32.totalorder %s20, 0
      %p41 = por %p39, %p40
      %p42 = scmp.ne.s32.totalorder %s28, %s29
      %p43 = scmp.eq.s32.totalorder %s21, 1
      %p44 = por %p42, %p43
      %p46 = scmp.ne.s32.totalorder %s29, %s45
      %p47 = scmp.eq.s32.totalorder %s21, 0
      %p48 = por %p46, %p47
      %s50 = sadd.s32 %s49, 1
      %p53 = scmp.eq.s32.totalorder %s15, 1
      %p54 = scmp.ne.s32.totalorder %s49, %s51
      %p55 = scmp.eq.s32.totalorder %s15, 0
      %p56 = por %p54, %p55
      %p57 = scmp.ne.s32.totalorder %s49, %s51
      %p58 = scmp.eq.s32.totalorder %s20, 1
      %p59 = por %p57, %p58
      %p60 = scmp.ne.s32.totalorder %s51, %s52
      %p61 = scmp.eq.s32.totalorder %s20, 0
      %p62 = por %p60, %p61
      %p63 = scmp.ne.s32.totalorder %s51, %s52
      %p64 = scmp.eq.s32.totalorder %s21, 1
      %p65 = por %p63, %p64
      %p67 = scmp.ne.s32.totalorder %s52, %s66
      %p68 = scmp.eq.s32.totalorder %s21, 0
      %p69 = por %p67, %p68
      %s71 = sadd.s32 %s70, 1
      %p74 = scmp.eq.s32.totalorder %s15, 1
      %p75 = scmp.ne.s32.totalorder %s70, %s72
      %p76 = scmp.eq.s32.totalorder %s15, 0
      %p77 = por %p75, %p76
      %p78 = scmp.ne.s32.totalorder %s70, %s72
      %p79 = scmp.eq.s32.totalorder %s20, 1
      %p80 = por %p78, %p79
      %p81 = scmp.ne.s32.totalorder %s72, %s73
      %p82 = scmp.eq.s32.totalorder %s20, 0
      %p83 = por %p81, %p82
      %p84 = scmp.ne.s32.totalorder %s72, %s73
      %p85 = scmp.eq.s32.totalorder %s21, 1
      %p86 = por %p84, %p85
      %p88 = scmp.ne.s32.totalorder %s73, %s87
      %p89 = scmp.eq.s32.totalorder %s21, 0
      %p90 = por %p88, %p89
      %s92 = sadd.s32 %s91, 1
      %p95 = scmp.eq.s32.totalorder %s15, 1
      %p96 = scmp.ne.s32.totalorder %s91, %s93
      %p97 = scmp.eq.s32.totalorder %s15, 0
      %p98 = por %p96, %p97
      %p99 = scmp.ne.s32.totalorder %s91, %s93
      %p100 = scmp.eq.s32.totalorder %s20, 1
      %p101 = por %p99, %p100
      %p102 = scmp.ne.s32.totalorder %s93, %s94
      %p103 = scmp.eq.s32.totalorder %s20, 0
      %p104 = por %p102, %p103
      %p105 = scmp.ne.s32.totalorder %s93, %s94
      %p106 = scmp.eq.s32.totalorder %s21, 1
      %p107 = por %p105, %p106
      %p109 = scmp.ne.s32.totalorder %s94, %s108
      %p110 = scmp.eq.s32.totalorder %s21, 0
      %p111 = por %p109, %p110
      %s113 = sadd.s32 %s112, 1
      %p116 = scmp.eq.s32.totalorder %s15, 1
      %p117 = scmp.ne.s32.totalorder %s112, %s114
      %p118 = scmp.eq.s32.totalorder %s15, 0
      %p119 = por %p117, %p118
      %p120 = scmp.ne.s32.totalorder %s112, %s114
      %p121 = scmp.eq.s32.totalorder %s20, 1
      %p122 = por %p120, %p121
      %p123 = scmp.ne.s32.totalorder %s114, %s115
      %p124 = scmp.eq.s32.totalorder %s20, 0
      %p125 = por %p123, %p124
      %p126 = scmp.ne.s32.totalorder %s114, %s115
      %p127 = scmp.eq.s32.totalorder %s21, 1
      %p128 = por %p126, %p127
      %p130 = scmp.ne.s32.totalorder %s115, %s129
      %p131 = scmp.eq.s32.totalorder %s21, 0
      %p132 = por %p130, %p131
      %s134 = sadd.s32 %s133, 1
      %p137 = scmp.eq.s32.totalorder %s15, 1
      %p138 = scmp.ne.s32.totalorder %s133, %s135
      %p139 = scmp.eq.s32.totalorder %s15, 0
      %p140 = por %p138, %p139
      %p141 = scmp.ne.s32.totalorder %s133, %s135
      %p142 = scmp.eq.s32.totalorder %s20, 1
      %p143 = por %p141, %p142
      %p144 = scmp.ne.s32.totalorder %s135, %s136
      %p145 = scmp.eq.s32.totalorder %s20, 0
      %p146 = por %p144, %p145
      %p147 = scmp.ne.s32.totalorder %s135, %s136
      %p148 = scmp.eq.s32.totalorder %s21, 1
      %p149 = por %p147, %p148
      %p151 = scmp.ne.s32.totalorder %s136, %s150
      %p152 = scmp.eq.s32.totalorder %s21, 0
      %p153 = por %p151, %p152
      %s154 = ssub.s32 %s15, %s22
      %p155 = scmp.eq.s32.totalorder %s154, 0
      %s157 = sadd.s32 %s156, 1
      %s158 = scalar_select %p155, %s156, %s157
      %p161 = pneg %p155
      %p162 = scmp.eq.s32.totalorder %s15, 1
      %p163 = por %p161, %p162
      %p164 = scmp.ne.s32.totalorder %s156, %s159
      %p165 = scmp.eq.s32.totalorder %s15, 0
      %p166 = por %p164, %p165
      %p167 = scmp.ne.s32.totalorder %s156, %s159
      %p168 = scmp.eq.s32.totalorder %s20, 1
      %p169 = por %p167, %p168
      %p170 = scmp.ne.s32.totalorder %s159, %s160
      %p171 = scmp.eq.s32.totalorder %s20, 0
      %p172 = por %p170, %p171
      %p173 = scmp.ne.s32.totalorder %s159, %s160
      %p174 = scmp.eq.s32.totalorder %s21, 1
      %p175 = por %p173, %p174
      %p177 = scmp.ne.s32.totalorder %s160, %s176
      %p178 = scmp.eq.s32.totalorder %s21, 0
      %p179 = por %p177, %p178
      %p180 = scmp.le.s32.totalorder 1, %s15
      %p181 = scmp.lt.s32.totalorder %s15, 3
      %p182 = pnand %p180, %p181
      %p183 = pneg %p182
      // Predicated region
      $region9: #{tpu_custom_call.1} parent=5 // pred_check
        _
      $region10: #{tpu_custom_call.1} parent=5 // pred_check_branch
        %185 = sbr.rel (%p182) target = $region12
      $region11: #{tpu_custom_call.1} parent=5 // pred_region
        %s186 = ssub.s32 %s15, 1
        // Predicated region
        $region13: #{tpu_custom_call.1} parent=11 // pred_check
          %p187 = pneg %p62
        $region14: #{tpu_custom_call.1} parent=11 // pred_check_branch
          %189 = sbr.rel (%p187) target = $region16
        $region15: #{tpu_custom_call.1} parent=11 // pred_region
          _
        $region16: #{tpu_custom_call.1} parent=11 // pred_fallthru
          _
        // Predicated region
        $region17: #{tpu_custom_call.1} parent=11 // pred_check
          %p190 = pneg %p83
        $region18: #{tpu_custom_call.1} parent=11 // pred_check_branch
          %192 = sbr.rel (%p190) target = $region20
        $region19: #{tpu_custom_call.1} parent=11 // pred_region
          _
        $region20: #{tpu_custom_call.1} parent=11 // pred_fallthru
          _
        // Predicated region
        $region21: #{tpu_custom_call.1} parent=11 // pred_check
          %p193 = pneg %p104
        $region22: #{tpu_custom_call.1} parent=11 // pred_check_branch
          %195 = sbr.rel (%p193) target = $region24
        $region23: #{tpu_custom_call.1} parent=11 // pred_region
          _
        $region24: #{tpu_custom_call.1} parent=11 // pred_fallthru
          _
        // Predicated region
        $region25: #{tpu_custom_call.1} parent=11 // pred_check
          %p196 = pneg %p125
        $region26: #{tpu_custom_call.1} parent=11 // pred_check_branch
          %198 = sbr.rel (%p196) target = $region28
        $region27: #{tpu_custom_call.1} parent=11 // pred_region
          _
        $region28: #{tpu_custom_call.1} parent=11 // pred_fallthru
          _
        // Predicated region
        $region29: #{tpu_custom_call.1} parent=11 // pred_check
          %p199 = pneg %p146
        $region30: #{tpu_custom_call.1} parent=11 // pred_check_branch
          %201 = sbr.rel (%p199) target = $region32
        $region31: #{tpu_custom_call.1} parent=11 // pred_region
          _
        $region32: #{tpu_custom_call.1} parent=11 // pred_fallthru
          _
      $region12: #{tpu_custom_call.1} parent=5 // pred_fallthru
        _
      %p202 = scmp.lt.s32.totalorder %s15, 2
      // Predicated region
      $region33: #{tpu_custom_call.1} parent=5 // pred_check
        %p203 = pneg %p202
      $region34: #{tpu_custom_call.1} parent=5 // pred_check_branch
        %205 = sbr.rel (%p203) target = $region36
      $region35: #{tpu_custom_call.1} parent=5 // pred_region
        // Predicated region
        $region37: #{tpu_custom_call.1} parent=35 // pred_check
          %p206 = pneg %p35
        $region38: #{tpu_custom_call.1} parent=35 // pred_check_branch
          %208 = sbr.rel (%p206) target = $region40
        $region39: #{tpu_custom_call.1} parent=35 // pred_region
          %s209 = smul.u32 8, %s15
          %p210 = scmp.lt.s32.totalorder %s209, 15
          %s211 = scalar_select %p210, %s209, 15
          %s212 = smul.addr %s211, 4
          %s213 = scalar_lea.vmem %s0, %s212
          %s214 = smul.u32 8, %s15
        $region40: #{tpu_custom_call.1} parent=35 // pred_fallthru
          _
      $region36: #{tpu_custom_call.1} parent=5 // pred_fallthru
        _
      %p215 = scmp.le.s32.totalorder 1, %s15
      %p216 = scmp.lt.s32.totalorder %s15, 3
      %p217 = pnand %p215, %p216
      %p218 = pneg %p217
      // Predicated region
      $region41: #{tpu_custom_call.1} parent=5 // pred_check
        _
      $region42: #{tpu_custom_call.1} parent=5 // pred_check_branch
        %220 = sbr.rel (%p217) target = $region44
      $region43: #{tpu_custom_call.1} parent=5 // pred_region
        %s221 = ssub.s32 %s15, 1
        %s222 = smul.u32 8, %s20
        %p223 = scmp.lt.s32.totalorder %s222, 15
        %s224 = scalar_select %p223, %s222, 15
        %s225 = smul.addr %s224, 4
        %s226 = scalar_lea.vmem %s0, %s225
        %p227 = pneg %p41
        %p228 = pneg %p38
        %p229 = pneg %p62
        %p230 = pneg %p59
        %p231 = pneg %p83
        %p232 = pneg %p80
        %p233 = pneg %p104
        %p234 = pneg %p101
        %p235 = pneg %p125
        %p236 = pneg %p122
        %p237 = pneg %p146
        %p238 = pneg %p143
        %p239 = pneg %p172
        %p240 = pneg %p169
        %s241 = sand.u32 %s159, 1
        %s242 = scalar_lea.sflag [#allocation3], %s241
        %s243 = sand.u32 %s159, 1
        %s244 = smul.addr %s243, 64
        %s245 = scalar_lea.vmem [#allocation2], %s244
        %s246 = smul.u32 8, %s20
        %p247 = scmp.lt.s32.totalorder %s246, 15
        %s248 = scalar_select %p247, %s246, 15
        %s249 = smul.addr %s248, 4
        %s250 = scalar_lea.vmem %s0, %s249
        %s251 = smul.u32 8, %s20
        %s252 = smul.u32 8, %s20
        %v254 = vld [vmem:[%s250] sm:$0xf]
        %v255 = vld [vmem:[%s250 + $0x4] sm:$0xf]
        %v256 = vld [vmem:[%s250 + $0x8] sm:$0xf]
        %v257 = vld [vmem:[%s250 + $0xc] sm:$0xf]
        %v258 = vld [vmem:[%s250 + $0x10] sm:$0xf]
        %v259 = vld [vmem:[%s250 + $0x14] sm:$0xf]
        %v260 = vld [vmem:[%s250 + $0x18] sm:$0xf]
        %v261 = vld [vmem:[%s250 + $0x1c] sm:$0xf]
        %v262 = vld [vmem:[%s1] sm:$0xf]
        %v263 = vld [vmem:[%s1 + $0x4] sm:$0xf]
        %v264 = vld [vmem:[%s1 + $0x8] sm:$0xf]
        %v265 = vld [vmem:[%s1 + $0xc] sm:$0xf]
        %v266 = vld [vmem:[%s3] sm:$0x1]
        %v268 = vlaneseq
        %v269 = vshrl.u32 %v268, 7
        %v270 = vsub.s32 0, %v269
        %v271 = vrot.slane %v266, %v270
        %v281 = vunpack.c.l.b16 %v254
        %v282 = vunpack.c.l.b16 %v255
        %v283 = vunpack.c.l.b16 %v256
        %v284 = vunpack.c.l.b16 %v257
        %v285 = vunpack.c.l.b16 %v258
        %v286 = vunpack.c.l.b16 %v259
        %v287 = vunpack.c.l.b16 %v260
        %v288 = vunpack.c.l.b16 %v261
        %v289 = vpack.c.b16 %v282, %v281
        %v290 = vpack.c.b16 %v284, %v283
        %v291 = vpack.c.b16 %v286, %v285
        %v292 = vpack.c.b16 %v288, %v287
        %v297 = vunpack.c.l.b16 %v262
        %v298 = vunpack.c.l.b16 %v263
        %v299 = vunpack.c.l.b16 %v264
        %v300 = vunpack.c.l.b16 %v265
        %v301 = vpack.c.b16 %v298, %v297
        %v302 = vpack.c.b16 %v300, %v299
        %vm305 = vcmask 261120
        %v307 = vsel %vm305, %v289, 0
        %v310 = vsel %vm305, %v290, 0
        %v313 = vsel %vm305, %v291, 0
        %v316 = vsel %vm305, %v292, 0
        %318 = vmatprep.subr.bf16.mxu0 0
        %319 = vmatpush1.bf16.msra.mxu0 %v301
        %320 = vmatprep.subr.bf16.mxu0 0
        %321 = vmatpush1.bf16.msra.mxu0 %v302
        %322 = vmatprep.subr.bf16.mxu0 0
        %323 = vmatpush1.bf16.msra.mxu0 0
        %324 = vmatprep.subr.bf16.mxu0 0
        %325 = vmatpush1.bf16.msra.mxu0 0
        %326 = vmatprep.subr.bf16.mxu0 0
        %327 = vmatpush1.bf16.msra.mxu0 0
        %328 = vmatprep.subr.bf16.mxu0 0
        %329 = vmatpush1.bf16.msra.mxu0 0
        %330 = vmatprep.subr.bf16.mxu0 0
        %331 = vmatpush1.bf16.msra.mxu0 0
        %332 = vmatprep.subr.bf16.mxu0 0
        %333 = vmatpush1.bf16.msra.mxu0 0
        %334 = vmatprep.subr.bf16.mxu0 0
        %335 = vmatpush1.bf16.msra.mxu0 0
        %336 = vmatprep.subr.bf16.mxu0 0
        %337 = vmatpush1.bf16.msra.mxu0 0
        %338 = vmatprep.subr.bf16.mxu0 0
        %339 = vmatpush1.bf16.msra.mxu0 0
        %340 = vmatprep.subr.bf16.mxu0 0
        %341 = vmatpush1.bf16.msra.mxu0 0
        %342 = vmatprep.subr.bf16.mxu0 0
        %343 = vmatpush1.bf16.msra.mxu0 0
        %344 = vmatprep.subr.bf16.mxu0 0
        %345 = vmatpush1.bf16.msra.mxu0 0
        %346 = vmatprep.subr.bf16.mxu0 0
        %347 = vmatpush1.bf16.msra.mxu0 0
        %348 = vmatprep.subr.bf16.mxu0 0
        %349 = vmatpush1.bf16.msra.mxu0 0
        %350 = vmatprep.mubr.bf16.mxu0 0
        %351 = vmatmul.mubr.bf16.gmra.mrb[0].mxu0 %v307
        %v352 = vpop.f32.mrb[0].mxu0
        %v353 = vadd.f32 %v271, %v352
        %v354 = vpop.f32.mrb[0].mxu0
        %v355 = vpop.f32.mrb[0].mxu0
        %v356 = vadd.f32 %v271, %v355
        %v357 = vpop.f32.mrb[0].mxu0
        %358 = vmatprep.mubr.bf16.mxu0 0
        %359 = vmatmul.mubr.bf16.gmra.mrb[0].mxu0 %v310
        %v360 = vpop.f32.mrb[0].mxu0
        %v361 = vadd.f32 %v271, %v360
        %v362 = vpop.f32.mrb[0].mxu0
        %v363 = vpop.f32.mrb[0].mxu0
        %v364 = vadd.f32 %v271, %v363
        %v365 = vpop.f32.mrb[0].mxu0
        %366 = vmatprep.mubr.bf16.mxu0 0
        %367 = vmatmul.mubr.bf16.gmra.mrb[0].mxu0 %v313
        %v368 = vpop.f32.mrb[0].mxu0
        %v369 = vadd.f32 %v271, %v368
        %v370 = vpop.f32.mrb[0].mxu0
        %v371 = vpop.f32.mrb[0].mxu0
        %v372 = vadd.f32 %v271, %v371
        %v373 = vpop.f32.mrb[0].mxu0
        %374 = vmatprep.mubr.bf16.mxu0 0
        %375 = vmatmul.mubr.bf16.gmra.mrb[0].mxu0 %v316
        %v376 = vpop.f32.mrb[0].mxu0
        %v377 = vadd.f32 %v271, %v376
        %v378 = vpop.f32.mrb[0].mxu0
        %v379 = vpop.f32.mrb[0].mxu0
        %v380 = vadd.f32 %v271, %v379
        %v381 = vpop.f32.mrb[0].mxu0
        %382 = vdwg.mxu0
        %v383 = vlaneseq
        %v384 = vand.u32 %v383, 127
        %vm385 = vcmp.ge.s32.totalorder %v384, 64
        %vm386 = vcmp.lt.s32.totalorder %v384, 96
        %vm387 = vmand %vm385, %vm386
        %v388 = vld [vmem:[%s2] sm:$0xf]
        %v389 = vld [vmem:[%s2 + $0x4] sm:$0xf]
        %v390 = vld [vmem:[%s2 + $0x8] sm:$0xf]
        %v391 = vld [vmem:[%s2 + $0xc] sm:$0xf]
        %v396 = vunpack.c.l.b16 %v388
        %v397 = vunpack.c.l.b16 %v389
        %v398 = vunpack.c.l.b16 %v390
        %v399 = vunpack.c.l.b16 %v391
        %v400 = vpack.c.b16 %v397, %v396
        %v401 = vpack.c.b16 %v399, %v398
        %v405 = vsel %vm305, 0, 0
        %407 = vmatprep.subr.bf16.mxu0 0
        %408 = vmatpush1.bf16.msra.mxu0 %v400
        %409 = vmatprep.subr.bf16.mxu0 0
        %410 = vmatpush1.bf16.msra.mxu0 %v401
        %411 = vmatprep.subr.bf16.mxu0 0
        %412 = vmatpush1.bf16.msra.mxu0 0
        %413 = vmatprep.subr.bf16.mxu0 0
        %414 = vmatpush1.bf16.msra.mxu0 0
        %415 = vmatprep.subr.bf16.mxu0 0
        %416 = vmatpush1.bf16.msra.mxu0 0
        %417 = vmatprep.subr.bf16.mxu0 0
        %418 = vmatpush1.bf16.msra.mxu0 0
        %419 = vmatprep.subr.bf16.mxu0 0
        %420 = vmatpush1.bf16.msra.mxu0 0
        %421 = vmatprep.subr.bf16.mxu0 0
        %422 = vmatpush1.bf16.msra.mxu0 0
        %423 = vmatprep.subr.bf16.mxu0 0
        %424 = vmatpush1.bf16.msra.mxu0 0
        %425 = vmatprep.subr.bf16.mxu0 0
        %426 = vmatpush1.bf16.msra.mxu0 0
        %427 = vmatprep.subr.bf16.mxu0 0
        %428 = vmatpush1.bf16.msra.mxu0 0
        %429 = vmatprep.subr.bf16.mxu0 0
        %430 = vmatpush1.bf16.msra.mxu0 0
        %431 = vmatprep.subr.bf16.mxu0 0
        %432 = vmatpush1.bf16.msra.mxu0 0
        %433 = vmatprep.subr.bf16.mxu0 0
        %434 = vmatpush1.bf16.msra.mxu0 0
        %435 = vmatprep.subr.bf16.mxu0 0
        %436 = vmatpush1.bf16.msra.mxu0 0
        %437 = vmatprep.subr.bf16.mxu0 0
        %438 = vmatpush1.bf16.msra.mxu0 0
        %439 = vmatprep.mubr.bf16.mxu0 0
        %440 = vmatmul.mubr.bf16.gmra.mrb[0].mxu0 %v405
        %v441 = vpop.f32.mrb[0].mxu0
        %v442 = vadd.f32 0.0, %v441
        %v443 = vpop.f32.mrb[0].mxu0
        %v444 = vpop.f32.mrb[0].mxu0
        %v445 = vpop.f32.mrb[0].mxu0
        %446 = vdwg.mxu0
        %v447 = vadd.f32 %v353, %v442
        %v448 = vtanh.pop %v447
        %v449 = vmul.f32 %v448, 0.5
        %v450 = vadd.f32 %v449, 0.5
        %v451 = vsel %vm387, %v448, %v450
        %v452 = vmul.f32 %v451, 0.0
        %454 = vrot.lane.b32.xlu0 %v451, 64
        %v455 = vpop.permute.xlu0 %454
        %v457 = vmul.f32 %v451, %v455
        %459 = vrot.lane.b32.xlu0 %v457, 32
        %v460 = vpop.permute.xlu0 %459
        %v462 = vadd.f32 %v452, %v460
        %v463 = vtanh.pop %v462
        %465 = vrot.lane.b32.xlu0 %v463, 64
        %v466 = vpop.permute.xlu0 %465
        %v468 = vmul.f32 %v451, %v466
        %v469 = vpack.c.bf16 %v468, %v468
        %471 = vrot.lane.b32.xlu0 %v469, 32
        %v472 = vpop.permute.xlu0 %471
        %v474 = vsel %vm305, %v472, 0
        %476 = vmatprep.subr.bf16.mxu0 0
        %477 = vmatpush1.bf16.msra.mxu0 %v400
        %478 = vmatprep.subr.bf16.mxu0 0
        %479 = vmatpush1.bf16.msra.mxu0 %v401
        %480 = vmatprep.subr.bf16.mxu0 0
        %481 = vmatpush1.bf16.msra.mxu0 0
        %482 = vmatprep.subr.bf16.mxu0 0
        %483 = vmatpush1.bf16.msra.mxu0 0
        %484 = vmatprep.subr.bf16.mxu0 0
        %485 = vmatpush1.bf16.msra.mxu0 0
        %486 = vmatprep.subr.bf16.mxu0 0
        %487 = vmatpush1.bf16.msra.mxu0 0
        %488 = vmatprep.subr.bf16.mxu0 0
        %489 = vmatpush1.bf16.msra.mxu0 0
        %490 = vmatprep.subr.bf16.mxu0 0
        %491 = vmatpush1.bf16.msra.mxu0 0
        %492 = vmatprep.subr.bf16.mxu0 0
        %493 = vmatpush1.bf16.msra.mxu0 0
        %494 = vmatprep.subr.bf16.mxu0 0
        %495 = vmatpush1.bf16.msra.mxu0 0
        %496 = vmatprep.subr.bf16.mxu0 0
        %497 = vmatpush1.bf16.msra.mxu0 0
        %498 = vmatprep.subr.bf16.mxu0 0
        %499 = vmatpush1.bf16.msra.mxu0 0
        %500 = vmatprep.subr.bf16.mxu0 0
        %501 = vmatpush1.bf16.msra.mxu0 0
        %502 = vmatprep.subr.bf16.mxu0 0
        %503 = vmatpush1.bf16.msra.mxu0 0
        %504 = vmatprep.subr.bf16.mxu0 0
        %505 = vmatpush1.bf16.msra.mxu0 0
        %506 = vmatprep.subr.bf16.mxu0 0
        %507 = vmatpush1.bf16.msra.mxu0 0
        %508 = vmatprep.mubr.bf16.mxu0 0
        %509 = vmatmul.mubr.bf16.gmra.mrb[0].mxu0 %v474
        %v510 = vpop.f32.mrb[0].mxu0
        %v511 = vadd.f32 0.0, %v510
        %v512 = vpop.f32.mrb[0].mxu0
        %v513 = vpop.f32.mrb[0].mxu0
        %v514 = vpop.f32.mrb[0].mxu0
        %515 = vdwg.mxu0
        %v516 = vadd.f32 %v356, %v511
        %v517 = vtanh.pop %v516
        %v518 = vmul.f32 %v517, 0.5
        %v519 = vadd.f32 %v518, 0.5
        %v520 = vsel %vm387, %v517, %v519
        %v521 = vmul.f32 %v520, %v462
        %523 = vrot.lane.b32.xlu0 %v520, 64
        %v524 = vpop.permute.xlu0 %523
        %v526 = vmul.f32 %v520, %v524
        %528 = vrot.lane.b32.xlu0 %v526, 32
        %v529 = vpop.permute.xlu0 %528
        %v531 = vadd.f32 %v521, %v529
        %v532 = vtanh.pop %v531
        %534 = vrot.lane.b32.xlu0 %v532, 64
        %v535 = vpop.permute.xlu0 %534
        %v537 = vmul.f32 %v520, %v535
        %v538 = vpack.c.bf16 %v537, %v537
        %540 = vrot.lane.b32.xlu0 %v538, 32
        %v541 = vpop.permute.xlu0 %540
        %v543 = vsel %vm305, %v541, 0
        %545 = vmatprep.subr.bf16.mxu0 0
        %546 = vmatpush1.bf16.msra.mxu0 %v400
        %547 = vmatprep.subr.bf16.mxu0 0
        %548 = vmatpush1.bf16.msra.mxu0 %v401
        %549 = vmatprep.subr.bf16.mxu0 0
        %550 = vmatpush1.bf16.msra.mxu0 0
        %551 = vmatprep.subr.bf16.mxu0 0
        %552 = vmatpush1.bf16.msra.mxu0 0
        %553 = vmatprep.subr.bf16.mxu0 0
        %554 = vmatpush1.bf16.msra.mxu0 0
        %555 = vmatprep.subr.bf16.mxu0 0
        %556 = vmatpush1.bf16.msra.mxu0 0
        %557 = vmatprep.subr.bf16.mxu0 0
        %558 = vmatpush1.bf16.msra.mxu0 0
        %559 = vmatprep.subr.bf16.mxu0 0
        %560 = vmatpush1.bf16.msra.mxu0 0
        %561 = vmatprep.subr.bf16.mxu0 0
        %562 = vmatpush1.bf16.msra.mxu0 0
        %563 = vmatprep.subr.bf16.mxu0 0
        %564 = vmatpush1.bf16.msra.mxu0 0
        %565 = vmatprep.subr.bf16.mxu0 0
        %566 = vmatpush1.bf16.msra.mxu0 0
        %567 = vmatprep.subr.bf16.mxu0 0
        %568 = vmatpush1.bf16.msra.mxu0 0
        %569 = vmatprep.subr.bf16.mxu0 0
        %570 = vmatpush1.bf16.msra.mxu0 0
        %571 = vmatprep.subr.bf16.mxu0 0
        %572 = vmatpush1.bf16.msra.mxu0 0
        %573 = vmatprep.subr.bf16.mxu0 0
        %574 = vmatpush1.bf16.msra.mxu0 0
        %575 = vmatprep.subr.bf16.mxu0 0
        %576 = vmatpush1.bf16.msra.mxu0 0
        %577 = vmatprep.mubr.bf16.mxu0 0
        %578 = vmatmul.mubr.bf16.gmra.mrb[0].mxu0 %v543
        %v579 = vpop.f32.mrb[0].mxu0
        %v580 = vadd.f32 0.0, %v579
        %v581 = vpop.f32.mrb[0].mxu0
        %v582 = vpop.f32.mrb[0].mxu0
        %v583 = vpop.f32.mrb[0].mxu0
        %584 = vdwg.mxu0
        %v585 = vadd.f32 %v361, %v580
        %v586 = vtanh.pop %v585
        %v587 = vmul.f32 %v586, 0.5
        %v588 = vadd.f32 %v587, 0.5
        %v589 = vsel %vm387, %v586, %v588
        %v590 = vmul.f32 %v589, %v531
        %592 = vrot.lane.b32.xlu0 %v589, 64
        %v593 = vpop.permute.xlu0 %592
        %v595 = vmul.f32 %v589, %v593
        %597 = vrot.lane.b32.xlu0 %v595, 32
        %v598 = vpop.permute.xlu0 %597
        %v600 = vadd.f32 %v590, %v598
        %v601 = vtanh.pop %v600
        %603 = vrot.lane.b32.xlu0 %v601, 64
        %v604 = vpop.permute.xlu0 %603
        %v606 = vmul.f32 %v589, %v604
        %v607 = vpack.c.bf16 %v606, %v606
        %609 = vrot.lane.b32.xlu0 %v607, 32
        %v610 = vpop.permute.xlu0 %609
        %v612 = vsel %vm305, %v610, 0
        %614 = vmatprep.subr.bf16.mxu0 0
        %615 = vmatpush1.bf16.msra.mxu0 %v400
        %616 = vmatprep.subr.bf16.mxu0 0
        %617 = vmatpush1.bf16.msra.mxu0 %v401
        %618 = vmatprep.subr.bf16.mxu0 0
        %619 = vmatpush1.bf16.msra.mxu0 0
        %620 = vmatprep.subr.bf16.mxu0 0
        %621 = vmatpush1.bf16.msra.mxu0 0
        %622 = vmatprep.subr.bf16.mxu0 0
        %623 = vmatpush1.bf16.msra.mxu0 0
        %624 = vmatprep.subr.bf16.mxu0 0
        %625 = vmatpush1.bf16.msra.mxu0 0
        %626 = vmatprep.subr.bf16.mxu0 0
        %627 = vmatpush1.bf16.msra.mxu0 0
        %628 = vmatprep.subr.bf16.mxu0 0
        %629 = vmatpush1.bf16.msra.mxu0 0
        %630 = vmatprep.subr.bf16.mxu0 0
        %631 = vmatpush1.bf16.msra.mxu0 0
        %632 = vmatprep.subr.bf16.mxu0 0
        %633 = vmatpush1.bf16.msra.mxu0 0
        %634 = vmatprep.subr.bf16.mxu0 0
        %635 = vmatpush1.bf16.msra.mxu0 0
        %636 = vmatprep.subr.bf16.mxu0 0
        %637 = vmatpush1.bf16.msra.mxu0 0
        %638 = vmatprep.subr.bf16.mxu0 0
        %639 = vmatpush1.bf16.msra.mxu0 0
        %640 = vmatprep.subr.bf16.mxu0 0
        %641 = vmatpush1.bf16.msra.mxu0 0
        %642 = vmatprep.subr.bf16.mxu0 0
        %643 = vmatpush1.bf16.msra.mxu0 0
        %644 = vmatprep.subr.bf16.mxu0 0
        %645 = vmatpush1.bf16.msra.mxu0 0
        %646 = vmatprep.mubr.bf16.mxu0 0
        %647 = vmatmul.mubr.bf16.gmra.mrb[0].mxu0 %v612
        %v648 = vpop.f32.mrb[0].mxu0
        %v649 = vadd.f32 0.0, %v648
        %v650 = vpop.f32.mrb[0].mxu0
        %v651 = vpop.f32.mrb[0].mxu0
        %v652 = vpop.f32.mrb[0].mxu0
        %653 = vdwg.mxu0
        %v654 = vadd.f32 %v364, %v649
        %v655 = vtanh.pop %v654
        %v656 = vmul.f32 %v655, 0.5
        %v657 = vadd.f32 %v656, 0.5
        %v658 = vsel %vm387, %v655, %v657
        %v659 = vmul.f32 %v658, %v600
        %661 = vrot.lane.b32.xlu0 %v658, 64
        %v662 = vpop.permute.xlu0 %661
        %v664 = vmul.f32 %v658, %v662
        %666 = vrot.lane.b32.xlu0 %v664, 32
        %v667 = vpop.permute.xlu0 %666
        %v669 = vadd.f32 %v659, %v667
        %v670 = vtanh.pop %v669
        %672 = vrot.lane.b32.xlu0 %v670, 64
        %v673 = vpop.permute.xlu0 %672
        %v675 = vmul.f32 %v658, %v673
        %v676 = vpack.c.bf16 %v675, %v675
        %678 = vrot.lane.b32.xlu0 %v676, 32
        %v679 = vpop.permute.xlu0 %678
        %v681 = vsel %vm305, %v679, 0
        %683 = vmatprep.subr.bf16.mxu0 0
        %684 = vmatpush1.bf16.msra.mxu0 %v400
        %685 = vmatprep.subr.bf16.mxu0 0
        %686 = vmatpush1.bf16.msra.mxu0 %v401
        %687 = vmatprep.subr.bf16.mxu0 0
        %688 = vmatpush1.bf16.msra.mxu0 0
        %689 = vmatprep.subr.bf16.mxu0 0
        %690 = vmatpush1.bf16.msra.mxu0 0
        %691 = vmatprep.subr.bf16.mxu0 0
        %692 = vmatpush1.bf16.msra.mxu0 0
        %693 = vmatprep.subr.bf16.mxu0 0
        %694 = vmatpush1.bf16.msra.mxu0 0
        %695 = vmatprep.subr.bf16.mxu0 0
        %696 = vmatpush1.bf16.msra.mxu0 0
        %697 = vmatprep.subr.bf16.mxu0 0
        %698 = vmatpush1.bf16.msra.mxu0 0
        %699 = vmatprep.subr.bf16.mxu0 0
        %700 = vmatpush1.bf16.msra.mxu0 0
        %701 = vmatprep.subr.bf16.mxu0 0
        %702 = vmatpush1.bf16.msra.mxu0 0
        %703 = vmatprep.subr.bf16.mxu0 0
        %704 = vmatpush1.bf16.msra.mxu0 0
        %705 = vmatprep.subr.bf16.mxu0 0
        %706 = vmatpush1.bf16.msra.mxu0 0
        %707 = vmatprep.subr.bf16.mxu0 0
        %708 = vmatpush1.bf16.msra.mxu0 0
        %709 = vmatprep.subr.bf16.mxu0 0
        %710 = vmatpush1.bf16.msra.mxu0 0
        %711 = vmatprep.subr.bf16.mxu0 0
        %712 = vmatpush1.bf16.msra.mxu0 0
        %713 = vmatprep.subr.bf16.mxu0 0
        %714 = vmatpush1.bf16.msra.mxu0 0
        %715 = vmatprep.mubr.bf16.mxu0 0
        %716 = vmatmul.mubr.bf16.gmra.mrb[0].mxu0 %v681
        %v717 = vpop.f32.mrb[0].mxu0
        %v718 = vadd.f32 0.0, %v717
        %v719 = vpop.f32.mrb[0].mxu0
        %v720 = vpop.f32.mrb[0].mxu0
        %v721 = vpop.f32.mrb[0].mxu0
        %722 = vdwg.mxu0
        %v723 = vadd.f32 %v369, %v718
        %v724 = vtanh.pop %v723
        %v725 = vmul.f32 %v724, 0.5
        %v726 = vadd.f32 %v725, 0.5
        %v727 = vsel %vm387, %v724, %v726
        %v728 = vmul.f32 %v727, %v669
        %730 = vrot.lane.b32.xlu0 %v727, 64
        %v731 = vpop.permute.xlu0 %730
        %v733 = vmul.f32 %v727, %v731
        %735 = vrot.lane.b32.xlu0 %v733, 32
        %v736 = vpop.permute.xlu0 %735
        %v738 = vadd.f32 %v728, %v736
        %v739 = vtanh.pop %v738
        %741 = vrot.lane.b32.xlu0 %v739, 64
        %v742 = vpop.permute.xlu0 %741
        %v744 = vmul.f32 %v727, %v742
        %v745 = vpack.c.bf16 %v744, %v744
        %747 = vrot.lane.b32.xlu0 %v745, 32
        %v748 = vpop.permute.xlu0 %747
        %v750 = vsel %vm305, %v748, 0
        %752 = vmatprep.subr.bf16.mxu0 0
        %753 = vmatpush1.bf16.msra.mxu0 %v400
        %754 = vmatprep.subr.bf16.mxu0 0
        %755 = vmatpush1.bf16.msra.mxu0 %v401
        %756 = vmatprep.subr.bf16.mxu0 0
        %757 = vmatpush1.bf16.msra.mxu0 0
        %758 = vmatprep.subr.bf16.mxu0 0
        %759 = vmatpush1.bf16.msra.mxu0 0
        %760 = vmatprep.subr.bf16.mxu0 0
        %761 = vmatpush1.bf16.msra.mxu0 0
        %762 = vmatprep.subr.bf16.mxu0 0
        %763 = vmatpush1.bf16.msra.mxu0 0
        %764 = vmatprep.subr.bf16.mxu0 0
        %765 = vmatpush1.bf16.msra.mxu0 0
        %766 = vmatprep.subr.bf16.mxu0 0
        %767 = vmatpush1.bf16.msra.mxu0 0
        %768 = vmatprep.subr.bf16.mxu0 0
        %769 = vmatpush1.bf16.msra.mxu0 0
        %770 = vmatprep.subr.bf16.mxu0 0
        %771 = vmatpush1.bf16.msra.mxu0 0
        %772 = vmatprep.subr.bf16.mxu0 0
        %773 = vmatpush1.bf16.msra.mxu0 0
        %774 = vmatprep.subr.bf16.mxu0 0
        %775 = vmatpush1.bf16.msra.mxu0 0
        %776 = vmatprep.subr.bf16.mxu0 0
        %777 = vmatpush1.bf16.msra.mxu0 0
        %778 = vmatprep.subr.bf16.mxu0 0
        %779 = vmatpush1.bf16.msra.mxu0 0
        %780 = vmatprep.subr.bf16.mxu0 0
        %781 = vmatpush1.bf16.msra.mxu0 0
        %782 = vmatprep.subr.bf16.mxu0 0
        %783 = vmatpush1.bf16.msra.mxu0 0
        %784 = vmatprep.mubr.bf16.mxu0 0
        %785 = vmatmul.mubr.bf16.gmra.mrb[0].mxu0 %v750
        %v786 = vpop.f32.mrb[0].mxu0
        %v787 = vadd.f32 0.0, %v786
        %v788 = vpop.f32.mrb[0].mxu0
        %v789 = vpop.f32.mrb[0].mxu0
        %v790 = vpop.f32.mrb[0].mxu0
        %791 = vdwg.mxu0
        %v792 = vadd.f32 %v372, %v787
        %v793 = vtanh.pop %v792
        %v794 = vmul.f32 %v793, 0.5
        %v795 = vadd.f32 %v794, 0.5
        %v796 = vsel %vm387, %v793, %v795
        %v797 = vmul.f32 %v796, %v738
        %799 = vrot.lane.b32.xlu0 %v796, 64
        %v800 = vpop.permute.xlu0 %799
        %v802 = vmul.f32 %v796, %v800
        %804 = vrot.lane.b32.xlu0 %v802, 32
        %v805 = vpop.permute.xlu0 %804
        %v807 = vadd.f32 %v797, %v805
        %v808 = vtanh.pop %v807
        %810 = vrot.lane.b32.xlu0 %v808, 64
        %v811 = vpop.permute.xlu0 %810
        %v813 = vmul.f32 %v796, %v811
        %v814 = vpack.c.bf16 %v813, %v813
        %816 = vrot.lane.b32.xlu0 %v814, 32
        %v817 = vpop.permute.xlu0 %816
        %v819 = vsel %vm305, %v817, 0
        %821 = vmatprep.subr.bf16.mxu0 0
        %822 = vmatpush1.bf16.msra.mxu0 %v400
        %823 = vmatprep.subr.bf16.mxu0 0
        %824 = vmatpush1.bf16.msra.mxu0 %v401
        %825 = vmatprep.subr.bf16.mxu0 0
        %826 = vmatpush1.bf16.msra.mxu0 0
        %827 = vmatprep.subr.bf16.mxu0 0
        %828 = vmatpush1.bf16.msra.mxu0 0
        %829 = vmatprep.subr.bf16.mxu0 0
        %830 = vmatpush1.bf16.msra.mxu0 0
        %831 = vmatprep.subr.bf16.mxu0 0
        %832 = vmatpush1.bf16.msra.mxu0 0
        %833 = vmatprep.subr.bf16.mxu0 0
        %834 = vmatpush1.bf16.msra.mxu0 0
        %835 = vmatprep.subr.bf16.mxu0 0
        %836 = vmatpush1.bf16.msra.mxu0 0
        %837 = vmatprep.subr.bf16.mxu0 0
        %838 = vmatpush1.bf16.msra.mxu0 0
        %839 = vmatprep.subr.bf16.mxu0 0
        %840 = vmatpush1.bf16.msra.mxu0 0
        %841 = vmatprep.subr.bf16.mxu0 0
        %842 = vmatpush1.bf16.msra.mxu0 0
        %843 = vmatprep.subr.bf16.mxu0 0
        %844 = vmatpush1.bf16.msra.mxu0 0
        %845 = vmatprep.subr.bf16.mxu0 0
        %846 = vmatpush1.bf16.msra.mxu0 0
        %847 = vmatprep.subr.bf16.mxu0 0
        %848 = vmatpush1.bf16.msra.mxu0 0
        %849 = vmatprep.subr.bf16.mxu0 0
        %850 = vmatpush1.bf16.msra.mxu0 0
        %851 = vmatprep.subr.bf16.mxu0 0
        %852 = vmatpush1.bf16.msra.mxu0 0
        %853 = vmatprep.mubr.bf16.mxu0 0
        %854 = vmatmul.mubr.bf16.gmra.mrb[0].mxu0 %v819
        %v855 = vpop.f32.mrb[0].mxu0
        %v856 = vadd.f32 0.0, %v855
        %v857 = vpop.f32.mrb[0].mxu0
        %v858 = vpop.f32.mrb[0].mxu0
        %v859 = vpop.f32.mrb[0].mxu0
        %860 = vdwg.mxu0
        %v861 = vadd.f32 %v377, %v856
        %v862 = vtanh.pop %v861
        %v863 = vmul.f32 %v862, 0.5
        %v864 = vadd.f32 %v863, 0.5
        %v865 = vsel %vm387, %v862, %v864
        %v866 = vmul.f32 %v865, %v807
        %868 = vrot.lane.b32.xlu0 %v865, 64
        %v869 = vpop.permute.xlu0 %868
        %v871 = vmul.f32 %v865, %v869
        %873 = vrot.lane.b32.xlu0 %v871, 32
        %v874 = vpop.permute.xlu0 %873
        %v876 = vadd.f32 %v866, %v874
        %v877 = vtanh.pop %v876
        %879 = vrot.lane.b32.xlu0 %v877, 64
        %v880 = vpop.permute.xlu0 %879
        %v882 = vmul.f32 %v865, %v880
        %v883 = vpack.c.bf16 %v882, %v882
        %885 = vrot.lane.b32.xlu0 %v883, 32
        %v886 = vpop.permute.xlu0 %885
        %v888 = vsel %vm305, %v886, 0
        %890 = vmatprep.subr.bf16.mxu0 0
        %891 = vmatpush1.bf16.msra.mxu0 %v400
        %892 = vmatprep.subr.bf16.mxu0 0
        %893 = vmatpush1.bf16.msra.mxu0 %v401
        %894 = vmatprep.subr.bf16.mxu0 0
        %895 = vmatpush1.bf16.msra.mxu0 0
        %896 = vmatprep.subr.bf16.mxu0 0
        %897 = vmatpush1.bf16.msra.mxu0 0
        %898 = vmatprep.subr.bf16.mxu0 0
        %899 = vmatpush1.bf16.msra.mxu0 0
        %900 = vmatprep.subr.bf16.mxu0 0
        %901 = vmatpush1.bf16.msra.mxu0 0
        %902 = vmatprep.subr.bf16.mxu0 0
        %903 = vmatpush1.bf16.msra.mxu0 0
        %904 = vmatprep.subr.bf16.mxu0 0
        %905 = vmatpush1.bf16.msra.mxu0 0
        %906 = vmatprep.subr.bf16.mxu0 0
        %907 = vmatpush1.bf16.msra.mxu0 0
        %908 = vmatprep.subr.bf16.mxu0 0
        %909 = vmatpush1.bf16.msra.mxu0 0
        %910 = vmatprep.subr.bf16.mxu0 0
        %911 = vmatpush1.bf16.msra.mxu0 0
        %912 = vmatprep.subr.bf16.mxu0 0
        %913 = vmatpush1.bf16.msra.mxu0 0
        %914 = vmatprep.subr.bf16.mxu0 0
        %915 = vmatpush1.bf16.msra.mxu0 0
        %916 = vmatprep.subr.bf16.mxu0 0
        %917 = vmatpush1.bf16.msra.mxu0 0
        %918 = vmatprep.subr.bf16.mxu0 0
        %919 = vmatpush1.bf16.msra.mxu0 0
        %920 = vmatprep.subr.bf16.mxu0 0
        %921 = vmatpush1.bf16.msra.mxu0 0
        %922 = vmatprep.mubr.bf16.mxu0 0
        %923 = vmatmul.mubr.bf16.gmra.mrb[0].mxu0 %v888
        %v924 = vpop.f32.mrb[0].mxu0
        %v925 = vadd.f32 0.0, %v924
        %v926 = vpop.f32.mrb[0].mxu0
        %v927 = vpop.f32.mrb[0].mxu0
        %v928 = vpop.f32.mrb[0].mxu0
        %929 = vdwg.mxu0
        %v930 = vadd.f32 %v380, %v925
        %v931 = vtanh.pop %v930
        %v932 = vmul.f32 %v931, 0.5
        %v933 = vadd.f32 %v932, 0.5
        %v934 = vsel %vm387, %v931, %v933
        %v935 = vmul.f32 %v934, %v876
        %937 = vrot.lane.b32.xlu0 %v934, 64
        %v938 = vpop.permute.xlu0 %937
        %v940 = vmul.f32 %v934, %v938
        %942 = vrot.lane.b32.xlu0 %v940, 32
        %v943 = vpop.permute.xlu0 %942
        %v945 = vadd.f32 %v935, %v943
        %v946 = vtanh.pop %v945
        %948 = vrot.lane.b32.xlu0 %v946, 64
        %v949 = vpop.permute.xlu0 %948
        %v951 = vmul.f32 %v934, %v949
        %v952 = vpack.c.bf16 %v537, %v468
        %v953 = vpack.c.bf16 %v675, %v606
        %v954 = vpack.c.bf16 %v813, %v744
        %v955 = vpack.c.bf16 %v951, %v882
        %v956 = vld [vmem:[%s4] sm:$0xf]
        %v957 = vld [vmem:[%s4 + $0x4] sm:$0xf]
        %v958 = vld [vmem:[%s4 + $0x8] sm:$0xf]
        %v959 = vld [vmem:[%s4 + $0xc] sm:$0xf]
        %v960 = vld [vmem:[%s5] sm:$0x1]
        %v962 = vlaneseq
        %v963 = vshrl.u32 %v962, 7
        %v964 = vsub.s32 0, %v963
        %v965 = vrot.slane %v960, %v964
        %971 = vrot.lane.b32.xlu0 %v952, 32
        %v972 = vpop.permute.xlu0 %971
        %973 = vrot.lane.b32.xlu0 %v953, 32
        %v974 = vpop.permute.xlu0 %973
        %975 = vrot.lane.b32.xlu0 %v954, 32
        %v976 = vpop.permute.xlu0 %975
        %977 = vrot.lane.b32.xlu0 %v955, 32
        %v978 = vpop.permute.xlu0 %977
        %v983 = vunpack.c.l.b16 %v956
        %v984 = vunpack.c.l.b16 %v957
        %v985 = vunpack.c.l.b16 %v958
        %v986 = vunpack.c.l.b16 %v959
        %v987 = vpack.c.b16 %v984, %v983
        %v988 = vpack.c.b16 %v986, %v985
        %v992 = vsel %vm305, %v972, 0
        %v995 = vsel %vm305, %v974, 0
        %v998 = vsel %vm305, %v976, 0
        %v1001 = vsel %vm305, %v978, 0
        %1003 = vmatprep.subr.bf16.mxu0 0
        %1004 = vmatpush1.bf16.msra.mxu0 %v987
        %1005 = vmatprep.subr.bf16.mxu0 0
        %1006 = vmatpush1.bf16.msra.mxu0 %v988
        %1007 = vmatprep.subr.bf16.mxu0 0
        %1008 = vmatpush1.bf16.msra.mxu0 0
        %1009 = vmatprep.subr.bf16.mxu0 0
        %1010 = vmatpush1.bf16.msra.mxu0 0
        %1011 = vmatprep.subr.bf16.mxu0 0
        %1012 = vmatpush1.bf16.msra.mxu0 0
        %1013 = vmatprep.subr.bf16.mxu0 0
        %1014 = vmatpush1.bf16.msra.mxu0 0
        %1015 = vmatprep.subr.bf16.mxu0 0
        %1016 = vmatpush1.bf16.msra.mxu0 0
        %1017 = vmatprep.subr.bf16.mxu0 0
        %1018 = vmatpush1.bf16.msra.mxu0 0
        %1019 = vmatprep.subr.bf16.mxu0 0
        %1020 = vmatpush1.bf16.msra.mxu0 0
        %1021 = vmatprep.subr.bf16.mxu0 0
        %1022 = vmatpush1.bf16.msra.mxu0 0
        %1023 = vmatprep.subr.bf16.mxu0 0
        %1024 = vmatpush1.bf16.msra.mxu0 0
        %1025 = vmatprep.subr.bf16.mxu0 0
        %1026 = vmatpush1.bf16.msra.mxu0 0
        %1027 = vmatprep.subr.bf16.mxu0 0
        %1028 = vmatpush1.bf16.msra.mxu0 0
        %1029 = vmatprep.subr.bf16.mxu0 0
        %1030 = vmatpush1.bf16.msra.mxu0 0
        %1031 = vmatprep.subr.bf16.mxu0 0
        %1032 = vmatpush1.bf16.msra.mxu0 0
        %1033 = vmatprep.subr.bf16.mxu0 0
        %1034 = vmatpush1.bf16.msra.mxu0 0
        %1035 = vmatprep.mubr.bf16.mxu0 0
        %1036 = vmatmul.mubr.bf16.gmra.mrb[0].mxu0 %v992
        %v1037 = vpop.f32.mrb[0].mxu0
        %v1038 = vadd.f32 %v965, %v1037
        %v1039 = vpop.f32.mrb[0].mxu0
        %v1040 = vpop.f32.mrb[0].mxu0
        %v1041 = vadd.f32 %v965, %v1040
        %v1042 = vpop.f32.mrb[0].mxu0
        %1043 = vmatprep.mubr.bf16.mxu0 0
        %1044 = vmatmul.mubr.bf16.gmra.mrb[0].mxu0 %v995
        %v1045 = vpop.f32.mrb[0].mxu0
        %v1046 = vadd.f32 %v965, %v1045
        %v1047 = vpop.f32.mrb[0].mxu0
        %v1048 = vpop.f32.mrb[0].mxu0
        %v1049 = vadd.f32 %v965, %v1048
        %v1050 = vpop.f32.mrb[0].mxu0
        %1051 = vmatprep.mubr.bf16.mxu0 0
        %1052 = vmatmul.mubr.bf16.gmra.mrb[0].mxu0 %v998
        %v1053 = vpop.f32.mrb[0].mxu0
        %v1054 = vadd.f32 %v965, %v1053
        %v1055 = vpop.f32.mrb[0].mxu0
        %v1056 = vpop.f32.mrb[0].mxu0
        %v1057 = vadd.f32 %v965, %v1056
        %v1058 = vpop.f32.mrb[0].mxu0
        %1059 = vmatprep.mubr.bf16.mxu0 0
        %1060 = vmatmul.mubr.bf16.gmra.mrb[0].mxu0 %v1001
        %v1061 = vpop.f32.mrb[0].mxu0
        %v1062 = vadd.f32 %v965, %v1061
        %v1063 = vpop.f32.mrb[0].mxu0
        %v1064 = vpop.f32.mrb[0].mxu0
        %v1065 = vadd.f32 %v965, %v1064
        %v1066 = vpop.f32.mrb[0].mxu0
        %1067 = vdwg.mxu0
        %1068 = vmax.xlane.f32.xlu0 %v1038
        %v1069 = vpop.xlane.xlu0 %1068
        %1070 = vmax.xlane.f32.xlu0 %v1041
        %v1071 = vpop.xlane.xlu0 %1070
        %1072 = vmax.xlane.f32.xlu0 %v1046
        %v1073 = vpop.xlane.xlu0 %1072
        %1074 = vmax.xlane.f32.xlu0 %v1049
        %v1075 = vpop.xlane.xlu0 %1074
        %1076 = vmax.xlane.f32.xlu0 %v1054
        %v1077 = vpop.xlane.xlu0 %1076
        %1078 = vmax.xlane.f32.xlu0 %v1057
        %v1079 = vpop.xlane.xlu0 %1078
        %1080 = vmax.xlane.f32.xlu0 %v1062
        %v1081 = vpop.xlane.xlu0 %1080
        %1082 = vmax.xlane.f32.xlu0 %v1065
        %v1083 = vpop.xlane.xlu0 %1082
        %v1084 = vsub.f32 %v1038, %v1069
        %v1085 = vsub.f32 %v1041, %v1071
        %v1086 = vsub.f32 %v1046, %v1073
        %v1087 = vsub.f32 %v1049, %v1075
        %v1088 = vsub.f32 %v1054, %v1077
        %v1089 = vsub.f32 %v1057, %v1079
        %v1090 = vsub.f32 %v1062, %v1081
        %v1091 = vsub.f32 %v1065, %v1083
        %v1092 = vmul.f32 %v1084, 1.442695
        %v1093 = vpow.pop %v1092
        %v1094 = vmul.f32 %v1085, 1.442695
        %v1095 = vpow.pop %v1094
        %v1096 = vmul.f32 %v1086, 1.442695
        %v1097 = vpow.pop %v1096
        %v1098 = vmul.f32 %v1087, 1.442695
        %v1099 = vpow.pop %v1098
        %v1100 = vmul.f32 %v1088, 1.442695
        %v1101 = vpow.pop %v1100
        %v1102 = vmul.f32 %v1089, 1.442695
        %v1103 = vpow.pop %v1102
        %v1104 = vmul.f32 %v1090, 1.442695
        %v1105 = vpow.pop %v1104
        %v1106 = vmul.f32 %v1091, 1.442695
        %v1107 = vpow.pop %v1106
        %1108 = vadd.xlane.f32.xlu0 %v1093
        %v1109 = vpop.xlane.xlu0 %1108
        %1110 = vadd.xlane.f32.xlu0 %v1095
        %v1111 = vpop.xlane.xlu0 %1110
        %1112 = vadd.xlane.f32.xlu0 %v1097
        %v1113 = vpop.xlane.xlu0 %1112
        %1114 = vadd.xlane.f32.xlu0 %v1099
        %v1115 = vpop.xlane.xlu0 %1114
        %1116 = vadd.xlane.f32.xlu0 %v1101
        %v1117 = vpop.xlane.xlu0 %1116
        %1118 = vadd.xlane.f32.xlu0 %v1103
        %v1119 = vpop.xlane.xlu0 %1118
        %1120 = vadd.xlane.f32.xlu0 %v1105
        %v1121 = vpop.xlane.xlu0 %1120
        %1122 = vadd.xlane.f32.xlu0 %v1107
        %v1123 = vpop.xlane.xlu0 %1122
        %v1124 = vlog2.pop %v1109
        %v1125 = vmul.f32 %v1124, 0.6931472
        %v1126 = vlog2.pop %v1111
        %v1127 = vmul.f32 %v1126, 0.6931472
        %v1128 = vlog2.pop %v1113
        %v1129 = vmul.f32 %v1128, 0.6931472
        %v1130 = vlog2.pop %v1115
        %v1131 = vmul.f32 %v1130, 0.6931472
        %v1132 = vlog2.pop %v1117
        %v1133 = vmul.f32 %v1132, 0.6931472
        %v1134 = vlog2.pop %v1119
        %v1135 = vmul.f32 %v1134, 0.6931472
        %v1136 = vlog2.pop %v1121
        %v1137 = vmul.f32 %v1136, 0.6931472
        %v1138 = vlog2.pop %v1123
        %v1139 = vmul.f32 %v1138, 0.6931472
        %v1140 = vsub.f32 %v1084, %v1125
        %v1141 = vsub.f32 %v1085, %v1127
        %v1142 = vsub.f32 %v1086, %v1129
        %v1143 = vsub.f32 %v1087, %v1131
        %v1144 = vsub.f32 %v1088, %v1133
        %v1145 = vsub.f32 %v1089, %v1135
        %v1146 = vsub.f32 %v1090, %v1137
        %v1147 = vsub.f32 %v1091, %v1139
        %1148 = vst [vmem:[%s245] sm:$0xff] %v1140
        %1149 = vst [vmem:[%s245 + $0x8] sm:$0xff] %v1141
        %1150 = vst [vmem:[%s245 + $0x10] sm:$0xff] %v1142
        %1151 = vst [vmem:[%s245 + $0x18] sm:$0xff] %v1143
        %1152 = vst [vmem:[%s245 + $0x20] sm:$0xff] %v1144
        %1153 = vst [vmem:[%s245 + $0x28] sm:$0xff] %v1145
        %1154 = vst [vmem:[%s245 + $0x30] sm:$0xff] %v1146
        %1155 = vst [vmem:[%s245 + $0x38] sm:$0xff] %v1147
        %s1156 = sand.u32 %s159, 1
        %s1157 = scalar_lea.sflag [#allocation3], %s1156
        %s1158 = sand.u32 %s159, 1
        %s1159 = smul.addr %s1158, 64
        %s1160 = scalar_lea.vmem [#allocation2], %s1159
        // Predicated region
        $region45: #{tpu_custom_call.1} parent=43 // pred_check
          %p1161 = pneg %p169
        $region46: #{tpu_custom_call.1} parent=43 // pred_check_branch
          %1163 = sbr.rel (%p1161) target = $region48
        $region47: #{tpu_custom_call.1} parent=43 // pred_region
          %s1164 = smul.u32 8, %s20
          %s1166 = ssub.s32 1024, 1024
          %1167 = vsyncadd %s1157, %s1166
          %s1168 = smul.addr %s1164, 128
          %s1169 = scalar_lea.hbm %s6, %s1168
          %s1170 = sshll.u32 %s1160, 4
          %s1171 = int_to_ptr.vmem [resolvable:$true] %s1170
          %1176 = dma.vmem_to_hbm [thread:$0]  %s1171, 1024, %s1169, %s1157, 128, 128, 8
        $region48: #{tpu_custom_call.1} parent=43 // pred_fallthru
          _
      $region44: #{tpu_custom_call.1} parent=5 // pred_fallthru
        _
      %p1177 = scmp.le.s32.totalorder 2, %s15
      // Predicated region
      $region49: #{tpu_custom_call.1} parent=5 // pred_check
        %p1178 = pneg %p1177
      $region50: #{tpu_custom_call.1} parent=5 // pred_check_branch
        %1180 = sbr.rel (%p1178) target = $region52
      $region51: #{tpu_custom_call.1} parent=5 // pred_region
        %s1181 = ssub.s32 %s15, 2
        // Predicated region
        $region53: #{tpu_custom_call.1} parent=51 // pred_check
          %p1182 = pneg %p175
        $region54: #{tpu_custom_call.1} parent=51 // pred_check_branch
          %1184 = sbr.rel (%p1182) target = $region56
        $region55: #{tpu_custom_call.1} parent=51 // pred_region
          %s1185 = sand.u32 %s160, 1
          %s1186 = scalar_lea.sflag [#allocation3], %s1185
          %s1187 = sand.u32 %s160, 1
          %s1188 = smul.addr %s1187, 64
          %s1189 = scalar_lea.vmem [#allocation2], %s1188
          %1190 = dma.done %s1186, 1024
        $region56: #{tpu_custom_call.1} parent=51 // pred_fallthru
          _
      $region52: #{tpu_custom_call.1} parent=5 // pred_fallthru
        _
    $region6: #{tpu_custom_call.1} parent=1 // loop_footer
      %s19 = sadd.s32 1, %s15
    $region7: #{tpu_custom_call.1} parent=1 // loop_footer_branch
      %14 = sbr.rel target = $region3
    $region8: #{tpu_custom_call.1} parent=1 // loop_exit
      _
    %1191 = vsyncpa [#allocation3], 1
    %s1192 = scalar_lea.sflag [#allocation3], 1
    %1193 = vsyncpa %s1192, 1

</llo_original>
